<compile_context>
chip_gen: v5e
topology: v5e:2x2
jax: 0.10.0
libtpu: 0.0.40
codegen_flags: <defaults>
</compile_context>

<pallas_src>
import math

import jax
import jax.numpy as jnp
from jax.experimental import pallas as pl
from jax.experimental.pallas import tpu as pltpu

_NEG_BIG = -1e30  # finite "-inf" for padded class lanes (exp underflows to 0)


def _round_up(n, m):
    return ((n + m - 1) // m) * m


def _cdiv(a, b):
    return -(-a // b)


def ff_classifier_kernel(x_ref, w1_ref, b1_ref, w2_ref, b2_ref, w3_ref, b3_ref, o_ref):
    """Fused MLP tile: (Linear -> ReLU) x2 -> Linear -> Softmax(dim=1)."""
    x = x_ref[...]  # already bf16 in HBM: x dominates traffic, stream it narrow

    # Layer 1: Linear + ReLU (bf16 MXU operands, f32 accumulate / elementwise)
    h1 = jnp.dot(x, w1_ref[...], preferred_element_type=jnp.float32) + b1_ref[...]
    h1 = jnp.maximum(h1, 0.0)

    # Layer 2: Linear + ReLU
    h2 = jnp.dot(h1.astype(jnp.bfloat16), w2_ref[...],
                 preferred_element_type=jnp.float32) + b2_ref[...]
    h2 = jnp.maximum(h2, 0.0)

    # Layer 3: Linear + Softmax over the (lane-padded) class dim.
    logits = jnp.dot(h2.astype(jnp.bfloat16), w3_ref[...],
                     preferred_element_type=jnp.float32) + b3_ref[...]

    m = jnp.max(logits, axis=1, keepdims=True)
    e = jnp.exp(logits - m)                       # padded lanes: exp(~-1e30) == 0
    denom = jnp.sum(e, axis=1, keepdims=True)
    # Exact division: the kernel is HBM-bound so the precise reciprocal is free
    # and keeps softmax rows summing to 1 (parity with torch.nn.Softmax).
    o_ref[...] = (e / denom).astype(o_ref.dtype)


def _resident_spec(shape, single_buffer):
    """Constant index_map => the operand stays resident in VMEM across steps.

    Buffered(1) drops the never-used second pipeline buffer for the resident
    weights/biases, freeing VMEM for a larger batch tile.
    """
    if single_buffer:
        return pl.BlockSpec(shape, lambda i: (0, 0), pipeline_mode=pl.Buffered(1))
    return pl.BlockSpec(shape, lambda i: (0, 0))


def _vmem_limit_bytes():
    """~48 MiB on v7x (64 MiB VMEM/TC), ~96 MiB on v5e/v6e (128 MiB VMEM)."""
    try:
        cap = int(pltpu.get_tpu_info().vmem_capacity_bytes)
    except Exception:
        cap = 64 * 1024 * 1024  # conservative (v7x-sized) fallback
    return min((3 * cap) // 4, 96 * 1024 * 1024)


def feed_forward_classifier(x, params, *, batch_tile=1024):
    """Flatten NCHW input and run the fused, batch-tiled Pallas kernel.

    x: (B, C, H, W) float32
    params: dict with w1 (D,H1), b1 (1,H1), w2 (H1,H2), b2 (1,H2),
            w3 (H2,NC), b3 (1,NC)  -- weights already transposed to (in, out).
    """
    b = x.shape[0]
    # 'b ... -> b (...)'; stream activations in bf16 (x is the dominant HBM
    # stream; bf16 halves its bytes and its double-buffer VMEM footprint).
    # TODO(synk): in a real pipeline, fuse this f32->bf16 cast into the
    # upstream producer so the f32 copy of x never round-trips through HBM.
    x_flat = x.reshape(b, -1).astype(jnp.bfloat16)
    d = x_flat.shape[1]

    w1, b1 = params["w1"], params["b1"]
    w2, b2 = params["w2"], params["b2"]
    w3, b3 = params["w3"], params["b3"]
    h1_dim, h2_dim, nc = w1.shape[1], w2.shape[1], w3.shape[1]

    # --- lane-dense output: pad class dim up to a multiple of 128 ----------
    nc_pad = _round_up(nc, 128)
    w3p = jnp.pad(w3, ((0, 0), (0, nc_pad - nc)))                     # zero cols
    b3p = jnp.pad(b3, ((0, 0), (0, nc_pad - nc)), constant_values=_NEG_BIG)

    # --- batch tiling --------------------------------------------------------
    #  * at least 2 (and an even number of) grid steps so both v7x TensorCores
    #    get work under dimension_semantics=("parallel",)
    #  * divisor-aware tile so padded rows (pure wasted HBM bytes) are minimal
    #  * tile is a multiple of 8 sublanes.
    n_steps = _cdiv(b, batch_tile)
    n_steps = max(2, n_steps + (n_steps % 2))
    tb = _round_up(_cdiv(b, n_steps), 8)
    b_pad = n_steps * tb
    if b_pad != b:
        x_flat = jnp.pad(x_flat, ((0, b_pad - b), (0, 0)))

    # Resident weights in bf16 (MXU fast path, half the VMEM); biases stay f32.
    w1b = w1.astype(jnp.bfloat16)
    w2b = w2.astype(jnp.bfloat16)
    w3b = w3p.astype(jnp.bfloat16)

    flops = 2 * b_pad * (d * h1_dim + h1_dim * h2_dim + h2_dim * nc_pad)
    bytes_accessed = (
        x_flat.size * 2                                    # bf16 activations
        + (w1b.size + w2b.size + w3b.size) * 2             # bf16 weights
        + (b1.size + b2.size + b3p.size) * 4               # f32 biases
        + b_pad * nc_pad * 4                               # f32 output
    )
    cost = pl.CostEstimate(
        flops=flops,
        transcendentals=b_pad * nc_pad,                    # exp per output lane
        bytes_accessed=bytes_accessed,
    )

    def run(single_buffer_weights):
        return pl.pallas_call(
            ff_classifier_kernel,
            out_shape=jax.ShapeDtypeStruct((b_pad, nc_pad), jnp.float32),
            grid=(n_steps,),
            in_specs=[
                pl.BlockSpec((tb, d), lambda i: (i, 0)),   # streamed x tile
                _resident_spec(w1b.shape, single_buffer_weights),
                _resident_spec(b1.shape, single_buffer_weights),
                _resident_spec(w2b.shape, single_buffer_weights),
                _resident_spec(b2.shape, single_buffer_weights),
                _resident_spec(w3b.shape, single_buffer_weights),
                _resident_spec(b3p.shape, single_buffer_weights),
            ],
            out_specs=pl.BlockSpec((tb, nc_pad), lambda i: (i, 0)),
            compiler_params=pltpu.CompilerParams(
                dimension_semantics=("parallel",),          # megacore shard on v7x
                vmem_limit_bytes=_vmem_limit_bytes(),
            ),
            cost_estimate=cost,
        )(x_flat, w1b, b1, w2b, b2, w3b, b3p)

    try:
        out = run(True)
    except Exception:
        # Fallback if single-buffering via pl.Buffered(1) is not supported by
        # this jax/Mosaic version; correctness and structure are unchanged.
        out = run(False)

    return out[:b, :nc]


def init_params(key, input_dim, hidden_dims, num_classes):
    """Deterministic init mimicking nn.Linear default: U(-1/sqrt(fan_in), +1/sqrt(fan_in))."""
    net_dims = [input_dim] + list(hidden_dims) + [num_classes]
    params = {}
    for i in range(len(net_dims) - 1):
        d_in, d_out = net_dims[i], net_dims[i + 1]
        key, kw, kb = jax.random.split(key, 3)
        bound = 1.0 / math.sqrt(d_in)
        # Stored transposed relative to PyTorch: (in, out) so kernel does x @ W.
        w = jax.random.uniform(kw, (d_in, d_out), jnp.float32, -bound, bound)
        bvec = jax.random.uniform(kb, (1, d_out), jnp.float32, -bound, bound)
        params[f"w{i + 1}"] = w
        params[f"b{i + 1}"] = bvec
    return params


def reference_forward(x, params):
    """Pure-JAX f32 reference of the same forward pass (sanity check)."""
    b = x.shape[0]
    h = x.reshape(b, -1)
    h = jnp.maximum(h @ params["w1"] + params["b1"], 0.0)
    h = jnp.maximum(h @ params["w2"] + params["b2"], 0.0)
    logits = h @ params["w3"] + params["b3"]
    return jax.nn.softmax(logits, axis=1)


if __name__ == "__main__":
    key = jax.random.PRNGKey(0)
    key, kx, kp = jax.random.split(key, 3)

    # Small shapes consistent with the module defaults: batch=2, NCHW input
    # flattened to input_dim = 4*16*16 = 1024, hidden_dims=[256, 128], 10 classes.
    B, C, H, W = 2, 4, 16, 16
    input_dim = C * H * W
    hidden_dims = [256, 128]
    num_classes = 10

    x = jax.random.normal(kx, (B, C, H, W), jnp.float32)
    params = init_params(kp, input_dim, hidden_dims, num_classes)

    out = feed_forward_classifier(x, params)
    out = jax.block_until_ready(out)

    ref = reference_forward(x, params)
    assert out.shape == (B, num_classes)
    # bf16 matmul operands => relaxed tolerance vs the f32 reference.
    assert jnp.allclose(out, ref, atol=2e-2, rtol=2e-2), "mismatch vs reference"
    # Softmax rows sum to 1 (exact division in-kernel).
    assert jnp.allclose(jnp.sum(out, axis=1), jnp.ones((B,)), atol=1e-3)

    print("KERNEL_OK")
</pallas_src>

<mosaic_0001>
module attributes {stable_mosaic.version = 11 : i64} {
  func.func @ff_classifier_kernel(%arg0: i32, %arg1: memref<8x1024xbf16, #tpu.memory_space<vmem>>, %arg2: memref<1024x256xbf16, #tpu.memory_space<vmem>>, %arg3: memref<1x256xf32, #tpu.memory_space<vmem>>, %arg4: memref<256x128xbf16, #tpu.memory_space<vmem>>, %arg5: memref<1x128xf32, #tpu.memory_space<vmem>>, %arg6: memref<128x128xbf16, #tpu.memory_space<vmem>>, %arg7: memref<1x128xf32, #tpu.memory_space<vmem>>, %arg8: memref<8x128xf32, #tpu.memory_space<vmem>>) attributes {dimension_semantics = [#tpu.dimension_semantics<parallel>], iteration_bounds = array<i64: 2>, scalar_prefetch = 0 : i64, scratch_operands = 0 : i64, tpu.core_type = #tpu.core_type<tc>, window_params = [{transform_indices = @transform_0, window_bounds = array<i64: 8, 1024>}, {pipeline_mode = #tpu.pipeline_mode<synchronous>, transform_indices = @transform_1, window_bounds = array<i64: 1024, 256>}, {pipeline_mode = #tpu.pipeline_mode<synchronous>, transform_indices = @transform_2, window_bounds = array<i64: 1, 256>}, {pipeline_mode = #tpu.pipeline_mode<synchronous>, transform_indices = @transform_3, window_bounds = array<i64: 256, 128>}, {pipeline_mode = #tpu.pipeline_mode<synchronous>, transform_indices = @transform_4, window_bounds = array<i64: 1, 128>}, {pipeline_mode = #tpu.pipeline_mode<synchronous>, transform_indices = @transform_5, window_bounds = array<i64: 128, 128>}, {pipeline_mode = #tpu.pipeline_mode<synchronous>, transform_indices = @transform_6, window_bounds = array<i64: 1, 128>}, {transform_indices = @transform_7, window_bounds = array<i64: 8, 128>}]} {
    %c0 = arith.constant 0 : index
    %c0_0 = arith.constant 0 : index
    %0 = vector.load %arg1[%c0, %c0_0] : memref<8x1024xbf16, #tpu.memory_space<vmem>>, vector<8x1024xbf16>
    %c0_1 = arith.constant 0 : index
    %c0_2 = arith.constant 0 : index
    %1 = vector.load %arg2[%c0_1, %c0_2] : memref<1024x256xbf16, #tpu.memory_space<vmem>>, vector<1024x256xbf16>
    %cst = arith.constant dense<0.000000e+00> : vector<8x256xf32>
    %2 = tpu.matmul %0, %1, %cst {dimension_numbers = #tpu.dot_dimension_numbers<[1], [0], [0], [1], [0, 0, 1, 1], [], []>} : vector<8x1024xbf16>, vector<1024x256xbf16>, vector<8x256xf32> -> vector<8x256xf32>
    %c0_3 = arith.constant 0 : index
    %c0_4 = arith.constant 0 : index
    %3 = vector.load %arg3[%c0_3, %c0_4] : memref<1x256xf32, #tpu.memory_space<vmem>>, vector<1x256xf32>
    %4 = vector.broadcast %3 : vector<1x256xf32> to vector<8x256xf32>
    %5 = arith.addf %2, %4 : vector<8x256xf32>
    %cst_5 = arith.constant 0.000000e+00 : f32
    %6 = vector.broadcast %cst_5 : f32 to vector<8x256xf32>
    %7 = arith.maximumf %5, %6 : vector<8x256xf32>
    %8 = arith.truncf %7 : vector<8x256xf32> to vector<8x256xbf16>
    %c0_6 = arith.constant 0 : index
    %c0_7 = arith.constant 0 : index
    %9 = vector.load %arg4[%c0_6, %c0_7] : memref<256x128xbf16, #tpu.memory_space<vmem>>, vector<256x128xbf16>
    %cst_8 = arith.constant dense<0.000000e+00> : vector<8x128xf32>
    %10 = tpu.matmul %8, %9, %cst_8 {dimension_numbers = #tpu.dot_dimension_numbers<[1], [0], [0], [1], [0, 0, 1, 1], [], []>} : vector<8x256xbf16>, vector<256x128xbf16>, vector<8x128xf32> -> vector<8x128xf32>
    %c0_9 = arith.constant 0 : index
    %c0_10 = arith.constant 0 : index
    %11 = vector.load %arg5[%c0_9, %c0_10] : memref<1x128xf32, #tpu.memory_space<vmem>>, vector<1x128xf32>
    %12 = vector.broadcast %11 : vector<1x128xf32> to vector<8x128xf32>
    %13 = arith.addf %10, %12 : vector<8x128xf32>
    %cst_11 = arith.constant 0.000000e+00 : f32
    %14 = vector.broadcast %cst_11 : f32 to vector<8x128xf32>
    %15 = arith.maximumf %13, %14 : vector<8x128xf32>
    %16 = arith.truncf %15 : vector<8x128xf32> to vector<8x128xbf16>
    %c0_12 = arith.constant 0 : index
    %c0_13 = arith.constant 0 : index
    %17 = vector.load %arg6[%c0_12, %c0_13] : memref<128x128xbf16, #tpu.memory_space<vmem>>, vector<128x128xbf16>
    %cst_14 = arith.constant dense<0.000000e+00> : vector<8x128xf32>
    %18 = tpu.matmul %16, %17, %cst_14 {dimension_numbers = #tpu.dot_dimension_numbers<[1], [0], [0], [1], [0, 0, 1, 1], [], []>} : vector<8x128xbf16>, vector<128x128xbf16>, vector<8x128xf32> -> vector<8x128xf32>
    %c0_15 = arith.constant 0 : index
    %c0_16 = arith.constant 0 : index
    %19 = vector.load %arg7[%c0_15, %c0_16] : memref<1x128xf32, #tpu.memory_space<vmem>>, vector<1x128xf32>
    %20 = vector.broadcast %19 : vector<1x128xf32> to vector<8x128xf32>
    %21 = arith.addf %18, %20 : vector<8x128xf32>
    %cst_17 = arith.constant dense<0xFF800000> : vector<8xf32>
    %22 = vector.multi_reduction <maximumf>, %21, %cst_17 [1] : vector<8x128xf32> to vector<8xf32>
    %23 = vector.shape_cast %22 : vector<8xf32> to vector<8x1xf32>
    %24 = vector.broadcast %23 : vector<8x1xf32> to vector<8x128xf32>
    %25 = arith.subf %21, %24 : vector<8x128xf32>
    %26 = math.exp %25 : vector<8x128xf32>
    %cst_18 = arith.constant dense<0.000000e+00> : vector<8xf32>
    %27 = vector.multi_reduction <add>, %26, %cst_18 [1] : vector<8x128xf32> to vector<8xf32>
    %28 = vector.shape_cast %27 : vector<8xf32> to vector<8x1xf32>
    %29 = vector.broadcast %28 : vector<8x1xf32> to vector<8x128xf32>
    %30 = arith.divf %26, %29 : vector<8x128xf32>
    %c0_19 = arith.constant 0 : index
    %c0_20 = arith.constant 0 : index
    %31 = vector.load %arg8[%c0_19, %c0_20] : memref<8x128xf32, #tpu.memory_space<vmem>>, vector<8x128xf32>
    tpu.vector_store %arg8[%c0_19, %c0_20], %30 {strides = array<i32>} : memref<8x128xf32, #tpu.memory_space<vmem>>, vector<8x128xf32>,
    return
  }
  func.func @transform_0(%arg0: i32) -> (i32, i32) {
    %c0_i32 = arith.constant 0 : i32
    %c0_i32_0 = arith.constant 0 : i32
    return %arg0, %c0_i32 : i32, i32
  }
  func.func @transform_1(%arg0: i32) -> (i32, i32) {
    %c0_i32 = arith.constant 0 : i32
    %c0_i32_0 = arith.constant 0 : i32
    %c0_i32_1 = arith.constant 0 : i32
    return %c0_i32, %c0_i32_0 : i32, i32
  }
  func.func @transform_2(%arg0: i32) -> (i32, i32) {
    %c0_i32 = arith.constant 0 : i32
    %c0_i32_0 = arith.constant 0 : i32
    %c0_i32_1 = arith.constant 0 : i32
    return %c0_i32, %c0_i32_0 : i32, i32
  }
  func.func @transform_3(%arg0: i32) -> (i32, i32) {
    %c0_i32 = arith.constant 0 : i32
    %c0_i32_0 = arith.constant 0 : i32
    %c0_i32_1 = arith.constant 0 : i32
    return %c0_i32, %c0_i32_0 : i32, i32
  }
  func.func @transform_4(%arg0: i32) -> (i32, i32) {
    %c0_i32 = arith.constant 0 : i32
    %c0_i32_0 = arith.constant 0 : i32
    %c0_i32_1 = arith.constant 0 : i32
    return %c0_i32, %c0_i32_0 : i32, i32
  }
  func.func @transform_5(%arg0: i32) -> (i32, i32) {
    %c0_i32 = arith.constant 0 : i32
    %c0_i32_0 = arith.constant 0 : i32
    %c0_i32_1 = arith.constant 0 : i32
    return %c0_i32, %c0_i32_0 : i32, i32
  }
  func.func @transform_6(%arg0: i32) -> (i32, i32) {
    %c0_i32 = arith.constant 0 : i32
    %c0_i32_0 = arith.constant 0 : i32
    %c0_i32_1 = arith.constant 0 : i32
    return %c0_i32, %c0_i32_0 : i32, i32
  }
  func.func @transform_7(%arg0: i32) -> (i32, i32) {
    %c0_i32 = arith.constant 0 : i32
    %c0_i32_0 = arith.constant 0 : i32
    return %arg0, %c0_i32 : i32, i32
  }
}

module attributes {stable_mosaic.version = 11 : i64} {
  func.func @ff_classifier_kernel(%arg0: i32, %arg1: memref<8x1024xbf16, #tpu.memory_space<vmem>>, %arg2: memref<1024x256xbf16, #tpu.memory_space<vmem>>, %arg3: memref<1x256xf32, #tpu.memory_space<vmem>>, %arg4: memref<256x128xbf16, #tpu.memory_space<vmem>>, %arg5: memref<1x128xf32, #tpu.memory_space<vmem>>, %arg6: memref<128x128xbf16, #tpu.memory_space<vmem>>, %arg7: memref<1x128xf32, #tpu.memory_space<vmem>>, %arg8: memref<8x128xf32, #tpu.memory_space<vmem>>) attributes {dimension_semantics = [#tpu.dimension_semantics<parallel>], iteration_bounds = array<i64: 2>, scalar_prefetch = 0 : i64, scratch_operands = 0 : i64, tpu.core_type = #tpu.core_type<tc>, window_params = [{transform_indices = @transform_0, window_bounds = array<i64: 8, 1024>}, {pipeline_mode = #tpu.pipeline_mode<synchronous>, transform_indices = @transform_1, window_bounds = array<i64: 1024, 256>}, {pipeline_mode = #tpu.pipeline_mode<synchronous>, transform_indices = @transform_2, window_bounds = array<i64: 1, 256>}, {pipeline_mode = #tpu.pipeline_mode<synchronous>, transform_indices = @transform_3, window_bounds = array<i64: 256, 128>}, {pipeline_mode = #tpu.pipeline_mode<synchronous>, transform_indices = @transform_4, window_bounds = array<i64: 1, 128>}, {pipeline_mode = #tpu.pipeline_mode<synchronous>, transform_indices = @transform_5, window_bounds = array<i64: 128, 128>}, {pipeline_mode = #tpu.pipeline_mode<synchronous>, transform_indices = @transform_6, window_bounds = array<i64: 1, 128>}, {transform_indices = @transform_7, window_bounds = array<i64: 8, 128>}]} {
    %c0 = arith.constant 0 : index
    %c0_0 = arith.constant 0 : index
    %0 = vector.load %arg1[%c0, %c0_0] : memref<8x1024xbf16, #tpu.memory_space<vmem>>, vector<8x1024xbf16>
    %c0_1 = arith.constant 0 : index
    %c0_2 = arith.constant 0 : index
    %1 = vector.load %arg2[%c0_1, %c0_2] : memref<1024x256xbf16, #tpu.memory_space<vmem>>, vector<1024x256xbf16>
    %cst = arith.constant dense<0.000000e+00> : vector<8x256xf32>
    %2 = tpu.matmul %0, %1, %cst {dimension_numbers = #tpu.dot_dimension_numbers<[1], [0], [0], [1], [0, 0, 1, 1], [], []>} : vector<8x1024xbf16>, vector<1024x256xbf16>, vector<8x256xf32> -> vector<8x256xf32>
    %c0_3 = arith.constant 0 : index
    %c0_4 = arith.constant 0 : index
    %3 = vector.load %arg3[%c0_3, %c0_4] : memref<1x256xf32, #tpu.memory_space<vmem>>, vector<1x256xf32>
    %4 = vector.broadcast %3 : vector<1x256xf32> to vector<8x256xf32>
    %5 = arith.addf %2, %4 : vector<8x256xf32>
    %cst_5 = arith.constant 0.000000e+00 : f32
    %6 = vector.broadcast %cst_5 : f32 to vector<8x256xf32>
    %7 = arith.maximumf %5, %6 : vector<8x256xf32>
    %8 = arith.truncf %7 : vector<8x256xf32> to vector<8x256xbf16>
    %c0_6 = arith.constant 0 : index
    %c0_7 = arith.constant 0 : index
    %9 = vector.load %arg4[%c0_6, %c0_7] : memref<256x128xbf16, #tpu.memory_space<vmem>>, vector<256x128xbf16>
    %cst_8 = arith.constant dense<0.000000e+00> : vector<8x128xf32>
    %10 = tpu.matmul %8, %9, %cst_8 {dimension_numbers = #tpu.dot_dimension_numbers<[1], [0], [0], [1], [0, 0, 1, 1], [], []>} : vector<8x256xbf16>, vector<256x128xbf16>, vector<8x128xf32> -> vector<8x128xf32>
    %c0_9 = arith.constant 0 : index
    %c0_10 = arith.constant 0 : index
    %11 = vector.load %arg5[%c0_9, %c0_10] : memref<1x128xf32, #tpu.memory_space<vmem>>, vector<1x128xf32>
    %12 = vector.broadcast %11 : vector<1x128xf32> to vector<8x128xf32>
    %13 = arith.addf %10, %12 : vector<8x128xf32>
    %cst_11 = arith.constant 0.000000e+00 : f32
    %14 = vector.broadcast %cst_11 : f32 to vector<8x128xf32>
    %15 = arith.maximumf %13, %14 : vector<8x128xf32>
    %16 = arith.truncf %15 : vector<8x128xf32> to vector<8x128xbf16>
    %c0_12 = arith.constant 0 : index
    %c0_13 = arith.constant 0 : index
    %17 = vector.load %arg6[%c0_12, %c0_13] : memref<128x128xbf16, #tpu.memory_space<vmem>>, vector<128x128xbf16>
    %cst_14 = arith.constant dense<0.000000e+00> : vector<8x128xf32>
    %18 = tpu.matmul %16, %17, %cst_14 {dimension_numbers = #tpu.dot_dimension_numbers<[1], [0], [0], [1], [0, 0, 1, 1], [], []>} : vector<8x128xbf16>, vector<128x128xbf16>, vector<8x128xf32> -> vector<8x128xf32>
    %c0_15 = arith.constant 0 : index
    %c0_16 = arith.constant 0 : index
    %19 = vector.load %arg7[%c0_15, %c0_16] : memref<1x128xf32, #tpu.memory_space<vmem>>, vector<1x128xf32>
    %20 = vector.broadcast %19 : vector<1x128xf32> to vector<8x128xf32>
    %21 = arith.addf %18, %20 : vector<8x128xf32>
    %cst_17 = arith.constant dense<0xFF800000> : vector<8xf32>
    %22 = vector.multi_reduction <maximumf>, %21, %cst_17 [1] : vector<8x128xf32> to vector<8xf32>
    %23 = vector.shape_cast %22 : vector<8xf32> to vector<8x1xf32>
    %24 = vector.broadcast %23 : vector<8x1xf32> to vector<8x128xf32>
    %25 = arith.subf %21, %24 : vector<8x128xf32>
    %26 = math.exp %25 : vector<8x128xf32>
    %cst_18 = arith.constant dense<0.000000e+00> : vector<8xf32>
    %27 = vector.multi_reduction <add>, %26, %cst_18 [1] : vector<8x128xf32> to vector<8xf32>
    %28 = vector.shape_cast %27 : vector<8xf32> to vector<8x1xf32>
    %29 = vector.broadcast %28 : vector<8x1xf32> to vector<8x128xf32>
    %30 = arith.divf %26, %29 : vector<8x128xf32>
    %c0_19 = arith.constant 0 : index
    %c0_20 = arith.constant 0 : index
    %31 = vector.load %arg8[%c0_19, %c0_20] : memref<8x128xf32, #tpu.memory_space<vmem>>, vector<8x128xf32>
    tpu.vector_store %arg8[%c0_19, %c0_20], %30 {strides = array<i32>} : memref<8x128xf32, #tpu.memory_space<vmem>>, vector<8x128xf32>,
    return
  }
  func.func @transform_0(%arg0: i32) -> (i32, i32) {
    %c0_i32 = arith.constant 0 : i32
    %c0_i32_0 = arith.constant 0 : i32
    return %arg0, %c0_i32 : i32, i32
  }
  func.func @transform_1(%arg0: i32) -> (i32, i32) {
    %c0_i32 = arith.constant 0 : i32
    %c0_i32_0 = arith.constant 0 : i32
    %c0_i32_1 = arith.constant 0 : i32
    return %c0_i32, %c0_i32_0 : i32, i32
  }
  func.func @transform_2(%arg0: i32) -> (i32, i32) {
    %c0_i32 = arith.constant 0 : i32
    %c0_i32_0 = arith.constant 0 : i32
    %c0_i32_1 = arith.constant 0 : i32
    return %c0_i32, %c0_i32_0 : i32, i32
  }
  func.func @transform_3(%arg0: i32) -> (i32, i32) {
    %c0_i32 = arith.constant 0 : i32
    %c0_i32_0 = arith.constant 0 : i32
    %c0_i32_1 = arith.constant 0 : i32
    return %c0_i32, %c0_i32_0 : i32, i32
  }
  func.func @transform_4(%arg0: i32) -> (i32, i32) {
    %c0_i32 = arith.constant 0 : i32
    %c0_i32_0 = arith.constant 0 : i32
    %c0_i32_1 = arith.constant 0 : i32
    return %c0_i32, %c0_i32_0 : i32, i32
  }
  func.func @transform_5(%arg0: i32) -> (i32, i32) {
    %c0_i32 = arith.constant 0 : i32
    %c0_i32_0 = arith.constant 0 : i32
    %c0_i32_1 = arith.constant 0 : i32
    return %c0_i32, %c0_i32_0 : i32, i32
  }
  func.func @transform_6(%arg0: i32) -> (i32, i32) {
    %c0_i32 = arith.constant 0 : i32
    %c0_i32_0 = arith.constant 0 : i32
    %c0_i32_1 = arith.constant 0 : i32
    return %c0_i32, %c0_i32_0 : i32, i32
  }
  func.func @transform_7(%arg0: i32) -> (i32, i32) {
    %c0_i32 = arith.constant 0 : i32
    %c0_i32_0 = arith.constant 0 : i32
    return %arg0, %c0_i32 : i32, i32
  }
}

</mosaic_0001>

<llo_original>
// kernel: tpu_custom_call.1
$region0: #{tpu_custom_call.1}
  #allocation0 [shape = 'u32[]', space=smem, size = 0x4, offset = 0x4, fixed_abs, tag = 'smem constant byte address 0x4 - core index']
  #allocation1 [shape = 'u32[72,128]{1,0:T(1,128)}', space=vmem, size = 0x9000, scoped, tag = 'internal scratch']
  %s0 = inlined_call_operand.hbm [shape: bf16[16,1024], index: 0, kind: input, shape index: {}]
  %s1 = inlined_call_operand.hbm [shape: bf16[1024,256], index: 1, kind: input, shape index: {}]
  %s2 = inlined_call_operand.hbm [shape: f32[1,256], index: 2, kind: input, shape index: {}]
  %s3 = inlined_call_operand.hbm [shape: bf16[256,128], index: 3, kind: input, shape index: {}]
  %s4 = inlined_call_operand.vmem [shape: f32[1,128], index: 4, kind: input, shape index: {}]
  %s5 = inlined_call_operand.hbm [shape: bf16[128,128], index: 5, kind: input, shape index: {}]
  %s6 = inlined_call_operand.vmem [shape: f32[1,128], index: 6, kind: input, shape index: {}]
  %s7 = inlined_call_operand.hbm [shape: f32[16,128], index: 7, kind: output, shape index: {}]
  %s8 = sld [smem:[#allocation0]]
  $region81: #{tpu_custom_call.1} parent=0
    _
  %s10 = ssub.s32 1, %s8
  %s11 = scalar_select 0, %s10, %s8
  $region1: #{tpu_custom_call.1} parent=0
    #allocation2 [shape = 'u8[32768]{0}', space=vmem, size = 0x8000, scoped, tag = 'input window, operand 0']
    #allocation3 [shape = 's32[2]{0}', space=sflag, size = 0x8, scoped, tag = 'scoped memory for tpu_custom_call.1']
    #allocation4 [shape = 's32[2]{0}', space=sflag, size = 0x8, scoped, tag = 'scoped memory for tpu_custom_call.1']
    #allocation5 [shape = 'u8[524288]{0}', space=vmem, size = 0x80000, scoped, tag = 'input window, operand 1, single buffered']
    #allocation6 [shape = 's32[1]{0}', space=sflag, size = 0x4, scoped, tag = 'scoped memory for tpu_custom_call.1']
    #allocation7 [shape = 'u8[1024]{0}', space=vmem, size = 0x400, scoped, tag = 'input window, operand 2, single buffered']
    #allocation8 [shape = 'u8[65536]{0}', space=vmem, size = 0x10000, scoped, tag = 'input window, operand 3, single buffered']
    #allocation9 [shape = 's32[1]{0}', space=sflag, size = 0x4, scoped, tag = 'scoped memory for tpu_custom_call.1']
    #allocation10 [shape = 'u8[32768]{0}', space=vmem, size = 0x8000, scoped, tag = 'input window, operand 5, single buffered']
    #allocation11 [shape = 'u8[8192]{0}', space=vmem, size = 0x2000, scoped, tag = 'output window, operand 0']
    %12 = vsyncpa [#allocation3], 0
    %s13 = scalar_lea.sflag [#allocation3], 1
    %14 = vsyncpa %s13, 0
    %15 = vsyncpa [#allocation6], 0
    %16 = vsyncpa [#allocation9], 0
    %17 = vsyncpa [#allocation4], 0
    %s18 = scalar_lea.sflag [#allocation4], 1
    %19 = vsyncpa %s18, 0
    loop: start=0, step=1, limit=4
    $region2: #{tpu_custom_call.1} parent=1 // loop_pre_header
      _
    $region3: #{tpu_custom_call.1} parent=1 // loop_header
      %s21 = sphi 0, %s25
      %p22 = scmp.ge.s32.totalorder %s21, 4
      %s31 = sphi 0, %s33
      %s34 = sphi 0, %s31
      %s35 = sphi 0, %s34
      %s51 = sphi 0, %s35
      %s55 = sphi 0, %s55
      %s57 = sphi 0, %s55
      %s58 = sphi 0, %s57
      %s72 = sphi 0, %s58
      %s76 = sphi 0, %s76
      %s78 = sphi 0, %s76
      %s79 = sphi 0, %s78
      %s93 = sphi 0, %s79
      %s97 = sphi 0, %s97
      %s99 = sphi 0, %s97
      %s100 = sphi 0, %s99
      %s114 = sphi 0, %s100
      %s118 = sphi 0, %s118
      %s120 = sphi 0, %s118
      %s121 = sphi 0, %s120
      %s135 = sphi 0, %s121
      %s139 = sphi 0, %s139
      %s141 = sphi 0, %s139
      %s142 = sphi 0, %s141
      %s156 = sphi 0, %s142
      %s160 = sphi 0, %s160
      %s162 = sphi 0, %s160
      %s163 = sphi 0, %s162
      %s177 = sphi 0, %s163
      %s183 = sphi 0, %s185
      %s186 = sphi 0, %s183
      %s187 = sphi 0, %s186
      %s203 = sphi 0, %s187
    $region4: #{tpu_custom_call.1} parent=1 // loop_header_branch
      %24 = sbr.rel (%p22) target = $region8
    $region5: #{tpu_custom_call.1} parent=1 // loop_body
      %s26 = ssub.s32 %s21, 1
      %s27 = ssub.s32 %s21, 2
      %s28 = sadd.s32 %s21, 1
      %s29 = ssub.s32 %s21, %s28
      %p30 = scmp.eq.s32.totalorder %s29, 0
      %s32 = sadd.s32 %s31, 1
      %s33 = scalar_select %p30, %s31, %s32
      %p36 = pneg %p30
      %p37 = scmp.eq.s32.totalorder %s21, 1
      %p38 = por %p36, %p37
      %p39 = scmp.ne.s32.totalorder %s31, %s34
      %p40 = scmp.eq.s32.totalorder %s21, 0
      %p41 = por %p39, %p40
      %p42 = scmp.ne.s32.totalorder %s31, %s34
      %p43 = scmp.eq.s32.totalorder %s26, 1
      %p44 = por %p42, %p43
      %p45 = scmp.ne.s32.totalorder %s34, %s35
      %p46 = scmp.eq.s32.totalorder %s26, 0
      %p47 = por %p45, %p46
      %p48 = scmp.ne.s32.totalorder %s34, %s35
      %p49 = scmp.eq.s32.totalorder %s27, 1
      %p50 = por %p48, %p49
      %p52 = scmp.ne.s32.totalorder %s35, %s51
      %p53 = scmp.eq.s32.totalorder %s27, 0
      %p54 = por %p52, %p53
      %s56 = sadd.s32 %s55, 1
      %p59 = scmp.eq.s32.totalorder %s21, 1
      %p60 = scmp.ne.s32.totalorder %s55, %s57
      %p61 = scmp.eq.s32.totalorder %s21, 0
      %p62 = por %p60, %p61
      %p63 = scmp.ne.s32.totalorder %s55, %s57
      %p64 = scmp.eq.s32.totalorder %s26, 1
      %p65 = por %p63, %p64
      %p66 = scmp.ne.s32.totalorder %s57, %s58
      %p67 = scmp.eq.s32.totalorder %s26, 0
      %p68 = por %p66, %p67
      %p69 = scmp.ne.s32.totalorder %s57, %s58
      %p70 = scmp.eq.s32.totalorder %s27, 1
      %p71 = por %p69, %p70
      %p73 = scmp.ne.s32.totalorder %s58, %s72
      %p74 = scmp.eq.s32.totalorder %s27, 0
      %p75 = por %p73, %p74
      %s77 = sadd.s32 %s76, 1
      %p80 = scmp.eq.s32.totalorder %s21, 1
      %p81 = scmp.ne.s32.totalorder %s76, %s78
      %p82 = scmp.eq.s32.totalorder %s21, 0
      %p83 = por %p81, %p82
      %p84 = scmp.ne.s32.totalorder %s76, %s78
      %p85 = scmp.eq.s32.totalorder %s26, 1
      %p86 = por %p84, %p85
      %p87 = scmp.ne.s32.totalorder %s78, %s79
      %p88 = scmp.eq.s32.totalorder %s26, 0
      %p89 = por %p87, %p88
      %p90 = scmp.ne.s32.totalorder %s78, %s79
      %p91 = scmp.eq.s32.totalorder %s27, 1
      %p92 = por %p90, %p91
      %p94 = scmp.ne.s32.totalorder %s79, %s93
      %p95 = scmp.eq.s32.totalorder %s27, 0
      %p96 = por %p94, %p95
      %s98 = sadd.s32 %s97, 1
      %p101 = scmp.eq.s32.totalorder %s21, 1
      %p102 = scmp.ne.s32.totalorder %s97, %s99
      %p103 = scmp.eq.s32.totalorder %s21, 0
      %p104 = por %p102, %p103
      %p105 = scmp.ne.s32.totalorder %s97, %s99
      %p106 = scmp.eq.s32.totalorder %s26, 1
      %p107 = por %p105, %p106
      %p108 = scmp.ne.s32.totalorder %s99, %s100
      %p109 = scmp.eq.s32.totalorder %s26, 0
      %p110 = por %p108, %p109
      %p111 = scmp.ne.s32.totalorder %s99, %s100
      %p112 = scmp.eq.s32.totalorder %s27, 1
      %p113 = por %p111, %p112
      %p115 = scmp.ne.s32.totalorder %s100, %s114
      %p116 = scmp.eq.s32.totalorder %s27, 0
      %p117 = por %p115, %p116
      %s119 = sadd.s32 %s118, 1
      %p122 = scmp.eq.s32.totalorder %s21, 1
      %p123 = scmp.ne.s32.totalorder %s118, %s120
      %p124 = scmp.eq.s32.totalorder %s21, 0
      %p125 = por %p123, %p124
      %p126 = scmp.ne.s32.totalorder %s118, %s120
      %p127 = scmp.eq.s32.totalorder %s26, 1
      %p128 = por %p126, %p127
      %p129 = scmp.ne.s32.totalorder %s120, %s121
      %p130 = scmp.eq.s32.totalorder %s26, 0
      %p131 = por %p129, %p130
      %p132 = scmp.ne.s32.totalorder %s120, %s121
      %p133 = scmp.eq.s32.totalorder %s27, 1
      %p134 = por %p132, %p133
      %p136 = scmp.ne.s32.totalorder %s121, %s135
      %p137 = scmp.eq.s32.totalorder %s27, 0
      %p138 = por %p136, %p137
      %s140 = sadd.s32 %s139, 1
      %p143 = scmp.eq.s32.totalorder %s21, 1
      %p144 = scmp.ne.s32.totalorder %s139, %s141
      %p145 = scmp.eq.s32.totalorder %s21, 0
      %p146 = por %p144, %p145
      %p147 = scmp.ne.s32.totalorder %s139, %s141
      %p148 = scmp.eq.s32.totalorder %s26, 1
      %p149 = por %p147, %p148
      %p150 = scmp.ne.s32.totalorder %s141, %s142
      %p151 = scmp.eq.s32.totalorder %s26, 0
      %p152 = por %p150, %p151
      %p153 = scmp.ne.s32.totalorder %s141, %s142
      %p154 = scmp.eq.s32.totalorder %s27, 1
      %p155 = por %p153, %p154
      %p157 = scmp.ne.s32.totalorder %s142, %s156
      %p158 = scmp.eq.s32.totalorder %s27, 0
      %p159 = por %p157, %p158
      %s161 = sadd.s32 %s160, 1
      %p164 = scmp.eq.s32.totalorder %s21, 1
      %p165 = scmp.ne.s32.totalorder %s160, %s162
      %p166 = scmp.eq.s32.totalorder %s21, 0
      %p167 = por %p165, %p166
      %p168 = scmp.ne.s32.totalorder %s160, %s162
      %p169 = scmp.eq.s32.totalorder %s26, 1
      %p170 = por %p168, %p169
      %p171 = scmp.ne.s32.totalorder %s162, %s163
      %p172 = scmp.eq.s32.totalorder %s26, 0
      %p173 = por %p171, %p172
      %p174 = scmp.ne.s32.totalorder %s162, %s163
      %p175 = scmp.eq.s32.totalorder %s27, 1
      %p176 = por %p174, %p175
      %p178 = scmp.ne.s32.totalorder %s163, %s177
      %p179 = scmp.eq.s32.totalorder %s27, 0
      %p180 = por %p178, %p179
      %s181 = ssub.s32 %s21, %s28
      %p182 = scmp.eq.s32.totalorder %s181, 0
      %s184 = sadd.s32 %s183, 1
      %s185 = scalar_select %p182, %s183, %s184
      %p188 = pneg %p182
      %p189 = scmp.eq.s32.totalorder %s21, 1
      %p190 = por %p188, %p189
      %p191 = scmp.ne.s32.totalorder %s183, %s186
      %p192 = scmp.eq.s32.totalorder %s21, 0
      %p193 = por %p191, %p192
      %p194 = scmp.ne.s32.totalorder %s183, %s186
      %p195 = scmp.eq.s32.totalorder %s26, 1
      %p196 = por %p194, %p195
      %p197 = scmp.ne.s32.totalorder %s186, %s187
      %p198 = scmp.eq.s32.totalorder %s26, 0
      %p199 = por %p197, %p198
      %p200 = scmp.ne.s32.totalorder %s186, %s187
      %p201 = scmp.eq.s32.totalorder %s27, 1
      %p202 = por %p200, %p201
      %p204 = scmp.ne.s32.totalorder %s187, %s203
      %p205 = scmp.eq.s32.totalorder %s27, 0
      %p206 = por %p204, %p205
      %p207 = scmp.le.s32.totalorder 1, %s21
      %p208 = scmp.lt.s32.totalorder %s21, 3
      %p209 = pnand %p207, %p208
      %p210 = pneg %p209
      // Predicated region
      $region9: #{tpu_custom_call.1} parent=5 // pred_check
        _
      $region10: #{tpu_custom_call.1} parent=5 // pred_check_branch
        %212 = sbr.rel (%p209) target = $region12
      $region11: #{tpu_custom_call.1} parent=5 // pred_region
        %s213 = ssub.s32 %s21, 1
        // Predicated region
        $region13: #{tpu_custom_call.1} parent=11 // pred_check
          %p214 = pneg %p68
        $region14: #{tpu_custom_call.1} parent=11 // pred_check_branch
          %216 = sbr.rel (%p214) target = $region16
        $region15: #{tpu_custom_call.1} parent=11 // pred_region
          %218 = vsyncadd [#allocation6], 0
          %s219 = sshll.u32 %s1, 4
          %s220 = int_to_ptr.hbm [resolvable:$true] %s219
          %s221 = sshll.u32 [#allocation5], 4
          %s222 = int_to_ptr.vmem [resolvable:$true] %s221
          %227 = dma.hbm_to_vmem [thread:$0]  %s220, 16384, %s222, [#allocation6], 128, 128, 8
        $region16: #{tpu_custom_call.1} parent=11 // pred_fallthru
          _
        // Predicated region
        $region17: #{tpu_custom_call.1} parent=11 // pred_check
          %p228 = pneg %p89
        $region18: #{tpu_custom_call.1} parent=11 // pred_check_branch
          %230 = sbr.rel (%p228) target = $region20
        $region19: #{tpu_custom_call.1} parent=11 // pred_region
          %232 = vsyncadd [#allocation6], 0
          %s234 = sshll.u32 %s2, 4
          %s235 = int_to_ptr.hbm [resolvable:$true] %s234
          %s236 = sshll.u32 [#allocation7], 4
          %s237 = int_to_ptr.vmem [resolvable:$true] %s236
          %239 = dma.hbm_to_vmem [thread:$0]  %s235, 32, %s237, [#allocation6]
        $region20: #{tpu_custom_call.1} parent=11 // pred_fallthru
          _
        // Predicated region
        $region21: #{tpu_custom_call.1} parent=11 // pred_check
          %p240 = pneg %p110
        $region22: #{tpu_custom_call.1} parent=11 // pred_check_branch
          %242 = sbr.rel (%p240) target = $region24
        $region23: #{tpu_custom_call.1} parent=11 // pred_region
          %244 = vsyncadd [#allocation9], 0
          %s245 = sshll.u32 %s3, 4
          %s246 = int_to_ptr.hbm [resolvable:$true] %s245
          %s247 = sshll.u32 [#allocation8], 4
          %s248 = int_to_ptr.vmem [resolvable:$true] %s247
          %253 = dma.hbm_to_vmem [thread:$0]  %s246, 2048, %s248, [#allocation9], 64, 64, 4
        $region24: #{tpu_custom_call.1} parent=11 // pred_fallthru
          _
        // Predicated region
        $region25: #{tpu_custom_call.1} parent=11 // pred_check
          %p254 = pneg %p131
        $region26: #{tpu_custom_call.1} parent=11 // pred_check_branch
          %256 = sbr.rel (%p254) target = $region28
        $region27: #{tpu_custom_call.1} parent=11 // pred_region
          _
        $region28: #{tpu_custom_call.1} parent=11 // pred_fallthru
          _
        // Predicated region
        $region29: #{tpu_custom_call.1} parent=11 // pred_check
          %p257 = pneg %p152
        $region30: #{tpu_custom_call.1} parent=11 // pred_check_branch
          %259 = sbr.rel (%p257) target = $region32
        $region31: #{tpu_custom_call.1} parent=11 // pred_region
          %261 = vsyncadd [#allocation9], 0
          %s262 = sshll.u32 %s5, 4
          %s263 = int_to_ptr.hbm [resolvable:$true] %s262
          %s264 = sshll.u32 [#allocation10], 4
          %s265 = int_to_ptr.vmem [resolvable:$true] %s264
          %270 = dma.hbm_to_vmem [thread:$0]  %s263, 1024, %s265, [#allocation9], 64, 64, 4
        $region32: #{tpu_custom_call.1} parent=11 // pred_fallthru
          _
        // Predicated region
        $region33: #{tpu_custom_call.1} parent=11 // pred_check
          %p271 = pneg %p173
        $region34: #{tpu_custom_call.1} parent=11 // pred_check_branch
          %273 = sbr.rel (%p271) target = $region36
        $region35: #{tpu_custom_call.1} parent=11 // pred_region
          _
        $region36: #{tpu_custom_call.1} parent=11 // pred_fallthru
          _
      $region12: #{tpu_custom_call.1} parent=5 // pred_fallthru
        _
      %p274 = scmp.lt.s32.totalorder %s21, 2
      // Predicated region
      $region37: #{tpu_custom_call.1} parent=5 // pred_check
        %p275 = pneg %p274
      $region38: #{tpu_custom_call.1} parent=5 // pred_check_branch
        %277 = sbr.rel (%p275) target = $region40
      $region39: #{tpu_custom_call.1} parent=5 // pred_region
        // Predicated region
        $region41: #{tpu_custom_call.1} parent=39 // pred_check
          %p278 = pneg %p41
        $region42: #{tpu_custom_call.1} parent=39 // pred_check_branch
          %280 = sbr.rel (%p278) target = $region44
        $region43: #{tpu_custom_call.1} parent=39 // pred_region
          %s281 = sand.u32 %s31, 1
          %s282 = scalar_lea.sflag [#allocation3], %s281
          %s283 = sand.u32 %s31, 1
          %s284 = smul.addr %s283, 32
          %s285 = scalar_lea.vmem [#allocation2], %s284
          %287 = vsyncadd %s282, 0
          %s288 = smul.addr %s21, 8
          %s289 = smul.addr %s288, 4
          %s290 = scalar_lea.hbm %s0, %s289
          %s292 = sshll.u32 %s290, 4
          %s293 = int_to_ptr.hbm [resolvable:$true] %s292
          %s294 = sshll.u32 %s285, 4
          %s295 = int_to_ptr.vmem [resolvable:$true] %s294
          %297 = dma.hbm_to_vmem [thread:$0]  %s293, 512, %s295, %s282
        $region44: #{tpu_custom_call.1} parent=39 // pred_fallthru
          _
      $region40: #{tpu_custom_call.1} parent=5 // pred_fallthru
        _
      %p298 = scmp.le.s32.totalorder 1, %s21
      %p299 = scmp.lt.s32.totalorder %s21, 3
      %p300 = pnand %p298, %p299
      %p301 = pneg %p300
      // Predicated region
      $region45: #{tpu_custom_call.1} parent=5 // pred_check
        _
      $region46: #{tpu_custom_call.1} parent=5 // pred_check_branch
        %303 = sbr.rel (%p300) target = $region48
      $region47: #{tpu_custom_call.1} parent=5 // pred_region
        %s304 = ssub.s32 %s21, 1
        %s305 = sand.u32 %s34, 1
        %s306 = scalar_lea.sflag [#allocation3], %s305
        %s307 = sand.u32 %s34, 1
        %s308 = smul.addr %s307, 32
        %s309 = scalar_lea.vmem [#allocation2], %s308
        // Predicated region
        $region49: #{tpu_custom_call.1} parent=47 // pred_check
          %p310 = pneg %p47
        $region50: #{tpu_custom_call.1} parent=47 // pred_check_branch
          %312 = sbr.rel (%p310) target = $region52
        $region51: #{tpu_custom_call.1} parent=47 // pred_region
          %314 = dma.done %s306, 512
        $region52: #{tpu_custom_call.1} parent=47 // pred_fallthru
          _
        // Predicated region
        $region53: #{tpu_custom_call.1} parent=47 // pred_check
          %p315 = pneg %p68
        $region54: #{tpu_custom_call.1} parent=47 // pred_check_branch
          %317 = sbr.rel (%p315) target = $region56
        $region55: #{tpu_custom_call.1} parent=47 // pred_region
          %319 = dma.done [#allocation6], 16384
        $region56: #{tpu_custom_call.1} parent=47 // pred_fallthru
          _
        // Predicated region
        $region57: #{tpu_custom_call.1} parent=47 // pred_check
          %p320 = pneg %p89
        $region58: #{tpu_custom_call.1} parent=47 // pred_check_branch
          %322 = sbr.rel (%p320) target = $region60
        $region59: #{tpu_custom_call.1} parent=47 // pred_region
          %324 = dma.done [#allocation6], 32
        $region60: #{tpu_custom_call.1} parent=47 // pred_fallthru
          _
        // Predicated region
        $region61: #{tpu_custom_call.1} parent=47 // pred_check
          %p325 = pneg %p110
        $region62: #{tpu_custom_call.1} parent=47 // pred_check_branch
          %327 = sbr.rel (%p325) target = $region64
        $region63: #{tpu_custom_call.1} parent=47 // pred_region
          %329 = dma.done [#allocation9], 2048
        $region64: #{tpu_custom_call.1} parent=47 // pred_fallthru
          _
        // Predicated region
        $region65: #{tpu_custom_call.1} parent=47 // pred_check
          %p330 = pneg %p152
        $region66: #{tpu_custom_call.1} parent=47 // pred_check_branch
          %332 = sbr.rel (%p330) target = $region68
        $region67: #{tpu_custom_call.1} parent=47 // pred_region
          %334 = dma.done [#allocation9], 1024
        $region68: #{tpu_custom_call.1} parent=47 // pred_fallthru
          _
        %s335 = sand.u32 %s34, 1
        %s336 = scalar_lea.sflag [#allocation3], %s335
        %s337 = sand.u32 %s34, 1
        %s338 = smul.addr %s337, 32
        %s339 = scalar_lea.vmem [#allocation2], %s338
        %p340 = pneg %p47
        %p341 = pneg %p44
        %p342 = pneg %p68
        %p343 = pneg %p65
        %p344 = pneg %p89
        %p345 = pneg %p86
        %p346 = pneg %p110
        %p347 = pneg %p107
        %p348 = pneg %p131
        %p349 = pneg %p128
        %p350 = pneg %p152
        %p351 = pneg %p149
        %p352 = pneg %p173
        %p353 = pneg %p170
        %p354 = pneg %p199
        %p355 = pneg %p196
        %s356 = sand.u32 %s186, 1
        %s357 = scalar_lea.sflag [#allocation4], %s356
        %s358 = sand.u32 %s186, 1
        %s359 = smul.addr %s358, 8
        %s360 = scalar_lea.vmem [#allocation11], %s359
        %v361 = vld [vmem:[%s309] sm:$0xff]
        %v362 = vld [vmem:[%s309 + $0x8] sm:$0xff]
        %v363 = vld [vmem:[%s309 + $0x10] sm:$0xff]
        %v364 = vld [vmem:[%s309 + $0x18] sm:$0xff]
        %v365 = vld [vmem:[#allocation5] sm:$0xff]
        %v366 = vld [vmem:[#allocation5 + $0x8] sm:$0xff]
        %v367 = vld [vmem:[#allocation5 + $0x10] sm:$0xff]
        %v368 = vld [vmem:[#allocation5 + $0x18] sm:$0xff]
        %v369 = vld [vmem:[#allocation5 + $0x20] sm:$0xff]
        %v370 = vld [vmem:[#allocation5 + $0x28] sm:$0xff]
        %v371 = vld [vmem:[#allocation5 + $0x30] sm:$0xff]
        %v372 = vld [vmem:[#allocation5 + $0x38] sm:$0xff]
        %v373 = vld [vmem:[#allocation5 + $0x40] sm:$0xff]
        %v374 = vld [vmem:[#allocation5 + $0x48] sm:$0xff]
        %v375 = vld [vmem:[#allocation5 + $0x50] sm:$0xff]
        %v376 = vld [vmem:[#allocation5 + $0x58] sm:$0xff]
        %v377 = vld [vmem:[#allocation5 + $0x60] sm:$0xff]
        %v378 = vld [vmem:[#allocation5 + $0x68] sm:$0xff]
        %v379 = vld [vmem:[#allocation5 + $0x70] sm:$0xff]
        %v380 = vld [vmem:[#allocation5 + $0x78] sm:$0xff]
        %v381 = vld [vmem:[#allocation5 + $0x80] sm:$0xff]
        %v382 = vld [vmem:[#allocation5 + $0x88] sm:$0xff]
        %v383 = vld [vmem:[#allocation5 + $0x90] sm:$0xff]
        %v384 = vld [vmem:[#allocation5 + $0x98] sm:$0xff]
        %v385 = vld [vmem:[#allocation5 + $0xa0] sm:$0xff]
        %v386 = vld [vmem:[#allocation5 + $0xa8] sm:$0xff]
        %v387 = vld [vmem:[#allocation5 + $0xb0] sm:$0xff]
        %v388 = vld [vmem:[#allocation5 + $0xb8] sm:$0xff]
        %v389 = vld [vmem:[#allocation5 + $0xc0] sm:$0xff]
        %v390 = vld [vmem:[#allocation5 + $0xc8] sm:$0xff]
        %v391 = vld [vmem:[#allocation5 + $0xd0] sm:$0xff]
        %v392 = vld [vmem:[#allocation5 + $0xd8] sm:$0xff]
        %v393 = vld [vmem:[#allocation5 + $0xe0] sm:$0xff]
        %v394 = vld [vmem:[#allocation5 + $0xe8] sm:$0xff]
        %v395 = vld [vmem:[#allocation5 + $0xf0] sm:$0xff]
        %v396 = vld [vmem:[#allocation5 + $0xf8] sm:$0xff]
        %v397 = vld [vmem:[#allocation5 + $0x100] sm:$0xff]
        %v398 = vld [vmem:[#allocation5 + $0x108] sm:$0xff]
        %v399 = vld [vmem:[#allocation5 + $0x110] sm:$0xff]
        %v400 = vld [vmem:[#allocation5 + $0x118] sm:$0xff]
        %v401 = vld [vmem:[#allocation5 + $0x120] sm:$0xff]
        %v402 = vld [vmem:[#allocation5 + $0x128] sm:$0xff]
        %v403 = vld [vmem:[#allocation5 + $0x130] sm:$0xff]
        %v404 = vld [vmem:[#allocation5 + $0x138] sm:$0xff]
        %v405 = vld [vmem:[#allocation5 + $0x140] sm:$0xff]
        %v406 = vld [vmem:[#allocation5 + $0x148] sm:$0xff]
        %v407 = vld [vmem:[#allocation5 + $0x150] sm:$0xff]
        %v408 = vld [vmem:[#allocation5 + $0x158] sm:$0xff]
        %v409 = vld [vmem:[#allocation5 + $0x160] sm:$0xff]
        %v410 = vld [vmem:[#allocation5 + $0x168] sm:$0xff]
        %v411 = vld [vmem:[#allocation5 + $0x170] sm:$0xff]
        %v412 = vld [vmem:[#allocation5 + $0x178] sm:$0xff]
        %v413 = vld [vmem:[#allocation5 + $0x180] sm:$0xff]
        %v414 = vld [vmem:[#allocation5 + $0x188] sm:$0xff]
        %v415 = vld [vmem:[#allocation5 + $0x190] sm:$0xff]
        %v416 = vld [vmem:[#allocation5 + $0x198] sm:$0xff]
        %v417 = vld [vmem:[#allocation5 + $0x1a0] sm:$0xff]
        %v418 = vld [vmem:[#allocation5 + $0x1a8] sm:$0xff]
        %v419 = vld [vmem:[#allocation5 + $0x1b0] sm:$0xff]
        %v420 = vld [vmem:[#allocation5 + $0x1b8] sm:$0xff]
        %v421 = vld [vmem:[#allocation5 + $0x1c0] sm:$0xff]
        %v422 = vld [vmem:[#allocation5 + $0x1c8] sm:$0xff]
        %v423 = vld [vmem:[#allocation5 + $0x1d0] sm:$0xff]
        %v424 = vld [vmem:[#allocation5 + $0x1d8] sm:$0xff]
        %v425 = vld [vmem:[#allocation5 + $0x1e0] sm:$0xff]
        %v426 = vld [vmem:[#allocation5 + $0x1e8] sm:$0xff]
        %v427 = vld [vmem:[#allocation5 + $0x1f0] sm:$0xff]
        %v428 = vld [vmem:[#allocation5 + $0x1f8] sm:$0xff]
        %v429 = vld [vmem:[#allocation5 + $0x200] sm:$0xff]
        %v430 = vld [vmem:[#allocation5 + $0x208] sm:$0xff]
        %v431 = vld [vmem:[#allocation5 + $0x210] sm:$0xff]
        %v432 = vld [vmem:[#allocation5 + $0x218] sm:$0xff]
        %v433 = vld [vmem:[#allocation5 + $0x220] sm:$0xff]
        %v434 = vld [vmem:[#allocation5 + $0x228] sm:$0xff]
        %v435 = vld [vmem:[#allocation5 + $0x230] sm:$0xff]
        %v436 = vld [vmem:[#allocation5 + $0x238] sm:$0xff]
        %v437 = vld [vmem:[#allocation5 + $0x240] sm:$0xff]
        %v438 = vld [vmem:[#allocation5 + $0x248] sm:$0xff]
        %v439 = vld [vmem:[#allocation5 + $0x250] sm:$0xff]
        %v440 = vld [vmem:[#allocation5 + $0x258] sm:$0xff]
        %v441 = vld [vmem:[#allocation5 + $0x260] sm:$0xff]
        %v442 = vld [vmem:[#allocation5 + $0x268] sm:$0xff]
        %v443 = vld [vmem:[#allocation5 + $0x270] sm:$0xff]
        %v444 = vld [vmem:[#allocation5 + $0x278] sm:$0xff]
        %v445 = vld [vmem:[#allocation5 + $0x280] sm:$0xff]
        %v446 = vld [vmem:[#allocation5 + $0x288] sm:$0xff]
        %v447 = vld [vmem:[#allocation5 + $0x290] sm:$0xff]
        %v448 = vld [vmem:[#allocation5 + $0x298] sm:$0xff]
        %v449 = vld [vmem:[#allocation5 + $0x2a0] sm:$0xff]
        %v450 = vld [vmem:[#allocation5 + $0x2a8] sm:$0xff]
        %v451 = vld [vmem:[#allocation5 + $0x2b0] sm:$0xff]
        %v452 = vld [vmem:[#allocation5 + $0x2b8] sm:$0xff]
        %v453 = vld [vmem:[#allocation5 + $0x2c0] sm:$0xff]
        %v454 = vld [vmem:[#allocation5 + $0x2c8] sm:$0xff]
        %v455 = vld [vmem:[#allocation5 + $0x2d0] sm:$0xff]
        %v456 = vld [vmem:[#allocation5 + $0x2d8] sm:$0xff]
        %v457 = vld [vmem:[#allocation5 + $0x2e0] sm:$0xff]
        %v458 = vld [vmem:[#allocation5 + $0x2e8] sm:$0xff]
        %v459 = vld [vmem:[#allocation5 + $0x2f0] sm:$0xff]
        %v460 = vld [vmem:[#allocation5 + $0x2f8] sm:$0xff]
        %v461 = vld [vmem:[#allocation5 + $0x300] sm:$0xff]
        %v462 = vld [vmem:[#allocation5 + $0x308] sm:$0xff]
        %v463 = vld [vmem:[#allocation5 + $0x310] sm:$0xff]
        %v464 = vld [vmem:[#allocation5 + $0x318] sm:$0xff]
        %v465 = vld [vmem:[#allocation5 + $0x320] sm:$0xff]
        %v466 = vld [vmem:[#allocation5 + $0x328] sm:$0xff]
        %v467 = vld [vmem:[#allocation5 + $0x330] sm:$0xff]
        %v468 = vld [vmem:[#allocation5 + $0x338] sm:$0xff]
        %v469 = vld [vmem:[#allocation5 + $0x340] sm:$0xff]
        %v470 = vld [vmem:[#allocation5 + $0x348] sm:$0xff]
        %v471 = vld [vmem:[#allocation5 + $0x350] sm:$0xff]
        %v472 = vld [vmem:[#allocation5 + $0x358] sm:$0xff]
        %v473 = vld [vmem:[#allocation5 + $0x360] sm:$0xff]
        %v474 = vld [vmem:[#allocation5 + $0x368] sm:$0xff]
        %v475 = vld [vmem:[#allocation5 + $0x370] sm:$0xff]
        %v476 = vld [vmem:[#allocation5 + $0x378] sm:$0xff]
        %v477 = vld [vmem:[#allocation5 + $0x380] sm:$0xff]
        %v478 = vld [vmem:[#allocation5 + $0x388] sm:$0xff]
        %v479 = vld [vmem:[#allocation5 + $0x390] sm:$0xff]
        %v480 = vld [vmem:[#allocation5 + $0x398] sm:$0xff]
        %v481 = vld [vmem:[#allocation5 + $0x3a0] sm:$0xff]
        %v482 = vld [vmem:[#allocation5 + $0x3a8] sm:$0xff]
        %v483 = vld [vmem:[#allocation5 + $0x3b0] sm:$0xff]
        %v484 = vld [vmem:[#allocation5 + $0x3b8] sm:$0xff]
        %v485 = vld [vmem:[#allocation5 + $0x3c0] sm:$0xff]
        %v486 = vld [vmem:[#allocation5 + $0x3c8] sm:$0xff]
        %v487 = vld [vmem:[#allocation5 + $0x3d0] sm:$0xff]
        %v488 = vld [vmem:[#allocation5 + $0x3d8] sm:$0xff]
        %v489 = vld [vmem:[#allocation5 + $0x3e0] sm:$0xff]
        %v490 = vld [vmem:[#allocation5 + $0x3e8] sm:$0xff]
        %v491 = vld [vmem:[#allocation5 + $0x3f0] sm:$0xff]
        %v492 = vld [vmem:[#allocation5 + $0x3f8] sm:$0xff]
        %v493 = vld [vmem:[#allocation7] sm:$0x3]
        %v495 = vperm.slane %v493, 0
        %v496 = vperm.slane %v493, 1
        %v503 = vunpack.c.l.b16 %v361
        %v504 = vunpack.c.h.b16 %v361
        %v505 = vunpack.c.l.b16 %v362
        %v506 = vunpack.c.h.b16 %v362
        %v507 = vunpack.c.l.b16 %v363
        %v508 = vunpack.c.h.b16 %v363
        %v509 = vunpack.c.l.b16 %v364
        %v510 = vunpack.c.h.b16 %v364
        %v511 = vpack.c.b16 %v503, %v503
        %v512 = vpack.c.b16 %v504, %v504
        %v513 = vpack.c.b16 %v505, %v505
        %v514 = vpack.c.b16 %v506, %v506
        %v515 = vpack.c.b16 %v507, %v507
        %v516 = vpack.c.b16 %v508, %v508
        %v517 = vpack.c.b16 %v509, %v509
        %v518 = vpack.c.b16 %v510, %v510
        %v655 = vunpack.c.l.b16 %v365
        %v656 = vunpack.c.h.b16 %v365
        %v657 = vunpack.c.l.b16 %v366
        %v658 = vunpack.c.h.b16 %v366
        %v659 = vunpack.c.l.b16 %v367
        %v660 = vunpack.c.h.b16 %v367
        %v661 = vunpack.c.l.b16 %v368
        %v662 = vunpack.c.h.b16 %v368
        %v663 = vunpack.c.l.b16 %v369
        %v664 = vunpack.c.h.b16 %v369
        %v665 = vunpack.c.l.b16 %v370
        %v666 = vunpack.c.h.b16 %v370
        %v667 = vunpack.c.l.b16 %v371
        %v668 = vunpack.c.h.b16 %v371
        %v669 = vunpack.c.l.b16 %v372
        %v670 = vunpack.c.h.b16 %v372
        %v671 = vunpack.c.l.b16 %v373
        %v672 = vunpack.c.h.b16 %v373
        %v673 = vunpack.c.l.b16 %v374
        %v674 = vunpack.c.h.b16 %v374
        %v675 = vunpack.c.l.b16 %v375
        %v676 = vunpack.c.h.b16 %v375
        %v677 = vunpack.c.l.b16 %v376
        %v678 = vunpack.c.h.b16 %v376
        %v679 = vunpack.c.l.b16 %v377
        %v680 = vunpack.c.h.b16 %v377
        %v681 = vunpack.c.l.b16 %v378
        %v682 = vunpack.c.h.b16 %v378
        %v683 = vunpack.c.l.b16 %v379
        %v684 = vunpack.c.h.b16 %v379
        %v685 = vunpack.c.l.b16 %v380
        %v686 = vunpack.c.h.b16 %v380
        %v687 = vunpack.c.l.b16 %v381
        %v688 = vunpack.c.h.b16 %v381
        %v689 = vunpack.c.l.b16 %v382
        %v690 = vunpack.c.h.b16 %v382
        %v691 = vunpack.c.l.b16 %v383
        %v692 = vunpack.c.h.b16 %v383
        %v693 = vunpack.c.l.b16 %v384
        %v694 = vunpack.c.h.b16 %v384
        %v695 = vunpack.c.l.b16 %v385
        %v696 = vunpack.c.h.b16 %v385
        %v697 = vunpack.c.l.b16 %v386
        %v698 = vunpack.c.h.b16 %v386
        %v699 = vunpack.c.l.b16 %v387
        %v700 = vunpack.c.h.b16 %v387
        %v701 = vunpack.c.l.b16 %v388
        %v702 = vunpack.c.h.b16 %v388
        %v703 = vunpack.c.l.b16 %v389
        %v704 = vunpack.c.h.b16 %v389
        %v705 = vunpack.c.l.b16 %v390
        %v706 = vunpack.c.h.b16 %v390
        %v707 = vunpack.c.l.b16 %v391
        %v708 = vunpack.c.h.b16 %v391
        %v709 = vunpack.c.l.b16 %v392
        %v710 = vunpack.c.h.b16 %v392
        %v711 = vunpack.c.l.b16 %v393
        %v712 = vunpack.c.h.b16 %v393
        %v713 = vunpack.c.l.b16 %v394
        %v714 = vunpack.c.h.b16 %v394
        %v715 = vunpack.c.l.b16 %v395
        %v716 = vunpack.c.h.b16 %v395
        %v717 = vunpack.c.l.b16 %v396
        %v718 = vunpack.c.h.b16 %v396
        %v719 = vunpack.c.l.b16 %v397
        %v720 = vunpack.c.h.b16 %v397
        %v721 = vunpack.c.l.b16 %v398
        %v722 = vunpack.c.h.b16 %v398
        %v723 = vunpack.c.l.b16 %v399
        %v724 = vunpack.c.h.b16 %v399
        %v725 = vunpack.c.l.b16 %v400
        %v726 = vunpack.c.h.b16 %v400
        %v727 = vunpack.c.l.b16 %v401
        %v728 = vunpack.c.h.b16 %v401
        %v729 = vunpack.c.l.b16 %v402
        %v730 = vunpack.c.h.b16 %v402
        %v731 = vunpack.c.l.b16 %v403
        %v732 = vunpack.c.h.b16 %v403
        %v733 = vunpack.c.l.b16 %v404
        %v734 = vunpack.c.h.b16 %v404
        %v735 = vunpack.c.l.b16 %v405
        %v736 = vunpack.c.h.b16 %v405
        %v737 = vunpack.c.l.b16 %v406
        %v738 = vunpack.c.h.b16 %v406
        %v739 = vunpack.c.l.b16 %v407
        %v740 = vunpack.c.h.b16 %v407
        %v741 = vunpack.c.l.b16 %v408
        %v742 = vunpack.c.h.b16 %v408
        %v743 = vunpack.c.l.b16 %v409
        %v744 = vunpack.c.h.b16 %v409
        %v745 = vunpack.c.l.b16 %v410
        %v746 = vunpack.c.h.b16 %v410
        %v747 = vunpack.c.l.b16 %v411
        %v748 = vunpack.c.h.b16 %v411
        %v749 = vunpack.c.l.b16 %v412
        %v750 = vunpack.c.h.b16 %v412
        %v751 = vunpack.c.l.b16 %v413
        %v752 = vunpack.c.h.b16 %v413
        %v753 = vunpack.c.l.b16 %v414
        %v754 = vunpack.c.h.b16 %v414
        %v755 = vunpack.c.l.b16 %v415
        %v756 = vunpack.c.h.b16 %v415
        %v757 = vunpack.c.l.b16 %v416
        %v758 = vunpack.c.h.b16 %v416
        %v759 = vunpack.c.l.b16 %v417
        %v760 = vunpack.c.h.b16 %v417
        %v761 = vunpack.c.l.b16 %v418
        %v762 = vunpack.c.h.b16 %v418
        %v763 = vunpack.c.l.b16 %v419
        %v764 = vunpack.c.h.b16 %v419
        %v765 = vunpack.c.l.b16 %v420
        %v766 = vunpack.c.h.b16 %v420
        %v767 = vunpack.c.l.b16 %v421
        %v768 = vunpack.c.h.b16 %v421
        %v769 = vunpack.c.l.b16 %v422
        %v770 = vunpack.c.h.b16 %v422
        %v771 = vunpack.c.l.b16 %v423
        %v772 = vunpack.c.h.b16 %v423
        %v773 = vunpack.c.l.b16 %v424
        %v774 = vunpack.c.h.b16 %v424
        %v775 = vunpack.c.l.b16 %v425
        %v776 = vunpack.c.h.b16 %v425
        %v777 = vunpack.c.l.b16 %v426
        %v778 = vunpack.c.h.b16 %v426
        %v779 = vunpack.c.l.b16 %v427
        %v780 = vunpack.c.h.b16 %v427
        %v781 = vunpack.c.l.b16 %v428
        %v782 = vunpack.c.h.b16 %v428
        %v783 = vunpack.c.l.b16 %v429
        %v784 = vunpack.c.h.b16 %v429
        %v785 = vunpack.c.l.b16 %v430
        %v786 = vunpack.c.h.b16 %v430
        %v787 = vunpack.c.l.b16 %v431
        %v788 = vunpack.c.h.b16 %v431
        %v789 = vunpack.c.l.b16 %v432
        %v790 = vunpack.c.h.b16 %v432
        %v791 = vunpack.c.l.b16 %v433
        %v792 = vunpack.c.h.b16 %v433
        %v793 = vunpack.c.l.b16 %v434
        %v794 = vunpack.c.h.b16 %v434
        %v795 = vunpack.c.l.b16 %v435
        %v796 = vunpack.c.h.b16 %v435
        %v797 = vunpack.c.l.b16 %v436
        %v798 = vunpack.c.h.b16 %v436
        %v799 = vunpack.c.l.b16 %v437
        %v800 = vunpack.c.h.b16 %v437
        %v801 = vunpack.c.l.b16 %v438
        %v802 = vunpack.c.h.b16 %v438
        %v803 = vunpack.c.l.b16 %v439
        %v804 = vunpack.c.h.b16 %v439
        %v805 = vunpack.c.l.b16 %v440
        %v806 = vunpack.c.h.b16 %v440
        %v807 = vunpack.c.l.b16 %v441
        %v808 = vunpack.c.h.b16 %v441
        %v809 = vunpack.c.l.b16 %v442
        %v810 = vunpack.c.h.b16 %v442
        %v811 = vunpack.c.l.b16 %v443
        %v812 = vunpack.c.h.b16 %v443
        %v813 = vunpack.c.l.b16 %v444
        %v814 = vunpack.c.h.b16 %v444
        %v815 = vunpack.c.l.b16 %v445
        %v816 = vunpack.c.h.b16 %v445
        %v817 = vunpack.c.l.b16 %v446
        %v818 = vunpack.c.h.b16 %v446
        %v819 = vunpack.c.l.b16 %v447
        %v820 = vunpack.c.h.b16 %v447
        %v821 = vunpack.c.l.b16 %v448
        %v822 = vunpack.c.h.b16 %v448
        %v823 = vunpack.c.l.b16 %v449
        %v824 = vunpack.c.h.b16 %v449
        %v825 = vunpack.c.l.b16 %v450
        %v826 = vunpack.c.h.b16 %v450
        %v827 = vunpack.c.l.b16 %v451
        %v828 = vunpack.c.h.b16 %v451
        %v829 = vunpack.c.l.b16 %v452
        %v830 = vunpack.c.h.b16 %v452
        %v831 = vunpack.c.l.b16 %v453
        %v832 = vunpack.c.h.b16 %v453
        %v833 = vunpack.c.l.b16 %v454
        %v834 = vunpack.c.h.b16 %v454
        %v835 = vunpack.c.l.b16 %v455
        %v836 = vunpack.c.h.b16 %v455
        %v837 = vunpack.c.l.b16 %v456
        %v838 = vunpack.c.h.b16 %v456
        %v839 = vunpack.c.l.b16 %v457
        %v840 = vunpack.c.h.b16 %v457
        %v841 = vunpack.c.l.b16 %v458
        %v842 = vunpack.c.h.b16 %v458
        %v843 = vunpack.c.l.b16 %v459
        %v844 = vunpack.c.h.b16 %v459
        %v845 = vunpack.c.l.b16 %v460
        %v846 = vunpack.c.h.b16 %v460
        %v847 = vunpack.c.l.b16 %v461
        %v848 = vunpack.c.h.b16 %v461
        %v849 = vunpack.c.l.b16 %v462
        %v850 = vunpack.c.h.b16 %v462
        %v851 = vunpack.c.l.b16 %v463
        %v852 = vunpack.c.h.b16 %v463
        %v853 = vunpack.c.l.b16 %v464
        %v854 = vunpack.c.h.b16 %v464
        %v855 = vunpack.c.l.b16 %v465
        %v856 = vunpack.c.h.b16 %v465
        %v857 = vunpack.c.l.b16 %v466
        %v858 = vunpack.c.h.b16 %v466
        %v859 = vunpack.c.l.b16 %v467
        %v860 = vunpack.c.h.b16 %v467
        %v861 = vunpack.c.l.b16 %v468
        %v862 = vunpack.c.h.b16 %v468
        %v863 = vunpack.c.l.b16 %v469
        %v864 = vunpack.c.h.b16 %v469
        %v865 = vunpack.c.l.b16 %v470
        %v866 = vunpack.c.h.b16 %v470
        %v867 = vunpack.c.l.b16 %v471
        %v868 = vunpack.c.h.b16 %v471
        %v869 = vunpack.c.l.b16 %v472
        %v870 = vunpack.c.h.b16 %v472
        %v871 = vunpack.c.l.b16 %v473
        %v872 = vunpack.c.h.b16 %v473
        %v873 = vunpack.c.l.b16 %v474
        %v874 = vunpack.c.h.b16 %v474
        %v875 = vunpack.c.l.b16 %v475
        %v876 = vunpack.c.h.b16 %v475
        %v877 = vunpack.c.l.b16 %v476
        %v878 = vunpack.c.h.b16 %v476
        %v879 = vunpack.c.l.b16 %v477
        %v880 = vunpack.c.h.b16 %v477
        %v881 = vunpack.c.l.b16 %v478
        %v882 = vunpack.c.h.b16 %v478
        %v883 = vunpack.c.l.b16 %v479
        %v884 = vunpack.c.h.b16 %v479
        %v885 = vunpack.c.l.b16 %v480
        %v886 = vunpack.c.h.b16 %v480
        %v887 = vunpack.c.l.b16 %v481
        %v888 = vunpack.c.h.b16 %v481
        %v889 = vunpack.c.l.b16 %v482
        %v890 = vunpack.c.h.b16 %v482
        %v891 = vunpack.c.l.b16 %v483
        %v892 = vunpack.c.h.b16 %v483
        %v893 = vunpack.c.l.b16 %v484
        %v894 = vunpack.c.h.b16 %v484
        %v895 = vunpack.c.l.b16 %v485
        %v896 = vunpack.c.h.b16 %v485
        %v897 = vunpack.c.l.b16 %v486
        %v898 = vunpack.c.h.b16 %v486
        %v899 = vunpack.c.l.b16 %v487
        %v900 = vunpack.c.h.b16 %v487
        %v901 = vunpack.c.l.b16 %v488
        %v902 = vunpack.c.h.b16 %v488
        %v903 = vunpack.c.l.b16 %v489
        %v904 = vunpack.c.h.b16 %v489
        %v905 = vunpack.c.l.b16 %v490
        %v906 = vunpack.c.h.b16 %v490
        %v907 = vunpack.c.l.b16 %v491
        %v908 = vunpack.c.h.b16 %v491
        %v909 = vunpack.c.l.b16 %v492
        %v910 = vunpack.c.h.b16 %v492
        %v911 = vpack.c.b16 %v657, %v655
        %v912 = vpack.c.b16 %v658, %v656
        %v913 = vpack.c.b16 %v661, %v659
        %v914 = vpack.c.b16 %v662, %v660
        %v915 = vpack.c.b16 %v665, %v663
        %v916 = vpack.c.b16 %v666, %v664
        %v917 = vpack.c.b16 %v669, %v667
        %v918 = vpack.c.b16 %v670, %v668
        %v919 = vpack.c.b16 %v673, %v671
        %v920 = vpack.c.b16 %v674, %v672
        %v921 = vpack.c.b16 %v677, %v675
        %v922 = vpack.c.b16 %v678, %v676
        %v923 = vpack.c.b16 %v681, %v679
        %v924 = vpack.c.b16 %v682, %v680
        %v925 = vpack.c.b16 %v685, %v683
        %v926 = vpack.c.b16 %v686, %v684
        %v927 = vpack.c.b16 %v689, %v687
        %v928 = vpack.c.b16 %v690, %v688
        %v929 = vpack.c.b16 %v693, %v691
        %v930 = vpack.c.b16 %v694, %v692
        %v931 = vpack.c.b16 %v697, %v695
        %v932 = vpack.c.b16 %v698, %v696
        %v933 = vpack.c.b16 %v701, %v699
        %v934 = vpack.c.b16 %v702, %v700
        %v935 = vpack.c.b16 %v705, %v703
        %v936 = vpack.c.b16 %v706, %v704
        %v937 = vpack.c.b16 %v709, %v707
        %v938 = vpack.c.b16 %v710, %v708
        %v939 = vpack.c.b16 %v713, %v711
        %v940 = vpack.c.b16 %v714, %v712
        %v941 = vpack.c.b16 %v717, %v715
        %v942 = vpack.c.b16 %v718, %v716
        %v943 = vpack.c.b16 %v721, %v719
        %v944 = vpack.c.b16 %v722, %v720
        %v945 = vpack.c.b16 %v725, %v723
        %v946 = vpack.c.b16 %v726, %v724
        %v947 = vpack.c.b16 %v729, %v727
        %v948 = vpack.c.b16 %v730, %v728
        %v949 = vpack.c.b16 %v733, %v731
        %v950 = vpack.c.b16 %v734, %v732
        %v951 = vpack.c.b16 %v737, %v735
        %v952 = vpack.c.b16 %v738, %v736
        %v953 = vpack.c.b16 %v741, %v739
        %v954 = vpack.c.b16 %v742, %v740
        %v955 = vpack.c.b16 %v745, %v743
        %v956 = vpack.c.b16 %v746, %v744
        %v957 = vpack.c.b16 %v749, %v747
        %v958 = vpack.c.b16 %v750, %v748
        %v959 = vpack.c.b16 %v753, %v751
        %v960 = vpack.c.b16 %v754, %v752
        %v961 = vpack.c.b16 %v757, %v755
        %v962 = vpack.c.b16 %v758, %v756
        %v963 = vpack.c.b16 %v761, %v759
        %v964 = vpack.c.b16 %v762, %v760
        %v965 = vpack.c.b16 %v765, %v763
        %v966 = vpack.c.b16 %v766, %v764
        %v967 = vpack.c.b16 %v769, %v767
        %v968 = vpack.c.b16 %v770, %v768
        %v969 = vpack.c.b16 %v773, %v771
        %v970 = vpack.c.b16 %v774, %v772
        %v971 = vpack.c.b16 %v777, %v775
        %v972 = vpack.c.b16 %v778, %v776
        %v973 = vpack.c.b16 %v781, %v779
        %v974 = vpack.c.b16 %v782, %v780
        %v975 = vpack.c.b16 %v785, %v783
        %v976 = vpack.c.b16 %v786, %v784
        %v977 = vpack.c.b16 %v789, %v787
        %v978 = vpack.c.b16 %v790, %v788
        %v979 = vpack.c.b16 %v793, %v791
        %v980 = vpack.c.b16 %v794, %v792
        %v981 = vpack.c.b16 %v797, %v795
        %v982 = vpack.c.b16 %v798, %v796
        %v983 = vpack.c.b16 %v801, %v799
        %v984 = vpack.c.b16 %v802, %v800
        %v985 = vpack.c.b16 %v805, %v803
        %v986 = vpack.c.b16 %v806, %v804
        %v987 = vpack.c.b16 %v809, %v807
        %v988 = vpack.c.b16 %v810, %v808
        %v989 = vpack.c.b16 %v813, %v811
        %v990 = vpack.c.b16 %v814, %v812
        %v991 = vpack.c.b16 %v817, %v815
        %v992 = vpack.c.b16 %v818, %v816
        %v993 = vpack.c.b16 %v821, %v819
        %v994 = vpack.c.b16 %v822, %v820
        %v995 = vpack.c.b16 %v825, %v823
        %v996 = vpack.c.b16 %v826, %v824
        %v997 = vpack.c.b16 %v829, %v827
        %v998 = vpack.c.b16 %v830, %v828
        %v999 = vpack.c.b16 %v833, %v831
        %v1000 = vpack.c.b16 %v834, %v832
        %v1001 = vpack.c.b16 %v837, %v835
        %v1002 = vpack.c.b16 %v838, %v836
        %v1003 = vpack.c.b16 %v841, %v839
        %v1004 = vpack.c.b16 %v842, %v840
        %v1005 = vpack.c.b16 %v845, %v843
        %v1006 = vpack.c.b16 %v846, %v844
        %v1007 = vpack.c.b16 %v849, %v847
        %v1008 = vpack.c.b16 %v850, %v848
        %v1009 = vpack.c.b16 %v853, %v851
        %v1010 = vpack.c.b16 %v854, %v852
        %v1011 = vpack.c.b16 %v857, %v855
        %v1012 = vpack.c.b16 %v858, %v856
        %v1013 = vpack.c.b16 %v861, %v859
        %v1014 = vpack.c.b16 %v862, %v860
        %v1015 = vpack.c.b16 %v865, %v863
        %v1016 = vpack.c.b16 %v866, %v864
        %v1017 = vpack.c.b16 %v869, %v867
        %v1018 = vpack.c.b16 %v870, %v868
        %v1019 = vpack.c.b16 %v873, %v871
        %v1020 = vpack.c.b16 %v874, %v872
        %v1021 = vpack.c.b16 %v877, %v875
        %v1022 = vpack.c.b16 %v878, %v876
        %v1023 = vpack.c.b16 %v881, %v879
        %v1024 = vpack.c.b16 %v882, %v880
        %v1025 = vpack.c.b16 %v885, %v883
        %v1026 = vpack.c.b16 %v886, %v884
        %v1027 = vpack.c.b16 %v889, %v887
        %v1028 = vpack.c.b16 %v890, %v888
        %v1029 = vpack.c.b16 %v893, %v891
        %v1030 = vpack.c.b16 %v894, %v892
        %v1031 = vpack.c.b16 %v897, %v895
        %v1032 = vpack.c.b16 %v898, %v896
        %v1033 = vpack.c.b16 %v901, %v899
        %v1034 = vpack.c.b16 %v902, %v900
        %v1035 = vpack.c.b16 %v905, %v903
        %v1036 = vpack.c.b16 %v906, %v904
        %v1037 = vpack.c.b16 %v909, %v907
        %v1038 = vpack.c.b16 %v910, %v908
        %1167 = vmatpush.bf16.msra.mxu0 %v925
        %1168 = vmatpush.bf16.msra.mxu0 %v923
        %1169 = vmatpush.bf16.msra.mxu0 %v921
        %1170 = vmatpush.bf16.msra.mxu0 %v919
        %1171 = vmatpush.bf16.msra.mxu0 %v917
        %1172 = vmatpush.bf16.msra.mxu0 %v915
        %1173 = vmatpush.bf16.msra.mxu0 %v913
        %1174 = vmatpush.bf16.msra.mxu0 %v911
        %1175 = vmatmul.bf16.gmra.mxu0 %v511
        %v1176 = vpop.f32.mrf.mxu0
        %v1177 = vadd.f32 %v495, %v1176
        %v1178 = vpop.f32.mrf.mxu0
        %1179 = vdwg.mxu0
        %1180 = vmatpush.bf16.msra.mxu0 %v941
        %1181 = vmatpush.bf16.msra.mxu0 %v939
        %1182 = vmatpush.bf16.msra.mxu0 %v937
        %1183 = vmatpush.bf16.msra.mxu0 %v935
        %1184 = vmatpush.bf16.msra.mxu0 %v933
        %1185 = vmatpush.bf16.msra.mxu0 %v931
        %1186 = vmatpush.bf16.msra.mxu0 %v929
        %1187 = vmatpush.bf16.msra.mxu0 %v927
        %1188 = vmatmul.bf16.gmra.mxu0 %v512
        %v1189 = vpop.f32.mrf.mxu0
        %v1190 = vadd.f32 %v1177, %v1189
        %v1191 = vpop.f32.mrf.mxu0
        %1192 = vdwg.mxu0
        %1193 = vmatpush.bf16.msra.mxu0 %v957
        %1194 = vmatpush.bf16.msra.mxu0 %v955
        %1195 = vmatpush.bf16.msra.mxu0 %v953
        %1196 = vmatpush.bf16.msra.mxu0 %v951
        %1197 = vmatpush.bf16.msra.mxu0 %v949
        %1198 = vmatpush.bf16.msra.mxu0 %v947
        %1199 = vmatpush.bf16.msra.mxu0 %v945
        %1200 = vmatpush.bf16.msra.mxu0 %v943
        %1201 = vmatmul.bf16.gmra.mxu0 %v513
        %v1202 = vpop.f32.mrf.mxu0
        %v1203 = vadd.f32 %v1190, %v1202
        %v1204 = vpop.f32.mrf.mxu0
        %1205 = vdwg.mxu0
        %1206 = vmatpush.bf16.msra.mxu0 %v973
        %1207 = vmatpush.bf16.msra.mxu0 %v971
        %1208 = vmatpush.bf16.msra.mxu0 %v969
        %1209 = vmatpush.bf16.msra.mxu0 %v967
        %1210 = vmatpush.bf16.msra.mxu0 %v965
        %1211 = vmatpush.bf16.msra.mxu0 %v963
        %1212 = vmatpush.bf16.msra.mxu0 %v961
        %1213 = vmatpush.bf16.msra.mxu0 %v959
        %1214 = vmatmul.bf16.gmra.mxu0 %v514
        %v1215 = vpop.f32.mrf.mxu0
        %v1216 = vadd.f32 %v1203, %v1215
        %v1217 = vpop.f32.mrf.mxu0
        %1218 = vdwg.mxu0
        %1219 = vmatpush.bf16.msra.mxu0 %v989
        %1220 = vmatpush.bf16.msra.mxu0 %v987
        %1221 = vmatpush.bf16.msra.mxu0 %v985
        %1222 = vmatpush.bf16.msra.mxu0 %v983
        %1223 = vmatpush.bf16.msra.mxu0 %v981
        %1224 = vmatpush.bf16.msra.mxu0 %v979
        %1225 = vmatpush.bf16.msra.mxu0 %v977
        %1226 = vmatpush.bf16.msra.mxu0 %v975
        %1227 = vmatmul.bf16.gmra.mxu0 %v515
        %v1228 = vpop.f32.mrf.mxu0
        %v1229 = vadd.f32 %v1216, %v1228
        %v1230 = vpop.f32.mrf.mxu0
        %1231 = vdwg.mxu0
        %1232 = vmatpush.bf16.msra.mxu0 %v1005
        %1233 = vmatpush.bf16.msra.mxu0 %v1003
        %1234 = vmatpush.bf16.msra.mxu0 %v1001
        %1235 = vmatpush.bf16.msra.mxu0 %v999
        %1236 = vmatpush.bf16.msra.mxu0 %v997
        %1237 = vmatpush.bf16.msra.mxu0 %v995
        %1238 = vmatpush.bf16.msra.mxu0 %v993
        %1239 = vmatpush.bf16.msra.mxu0 %v991
        %1240 = vmatmul.bf16.gmra.mxu0 %v516
        %v1241 = vpop.f32.mrf.mxu0
        %v1242 = vadd.f32 %v1229, %v1241
        %v1243 = vpop.f32.mrf.mxu0
        %1244 = vdwg.mxu0
        %1245 = vmatpush.bf16.msra.mxu0 %v1021
        %1246 = vmatpush.bf16.msra.mxu0 %v1019
        %1247 = vmatpush.bf16.msra.mxu0 %v1017
        %1248 = vmatpush.bf16.msra.mxu0 %v1015
        %1249 = vmatpush.bf16.msra.mxu0 %v1013
        %1250 = vmatpush.bf16.msra.mxu0 %v1011
        %1251 = vmatpush.bf16.msra.mxu0 %v1009
        %1252 = vmatpush.bf16.msra.mxu0 %v1007
        %1253 = vmatmul.bf16.gmra.mxu0 %v517
        %v1254 = vpop.f32.mrf.mxu0
        %v1255 = vadd.f32 %v1242, %v1254
        %v1256 = vpop.f32.mrf.mxu0
        %1257 = vdwg.mxu0
        %1258 = vmatpush.bf16.msra.mxu0 %v1037
        %1259 = vmatpush.bf16.msra.mxu0 %v1035
        %1260 = vmatpush.bf16.msra.mxu0 %v1033
        %1261 = vmatpush.bf16.msra.mxu0 %v1031
        %1262 = vmatpush.bf16.msra.mxu0 %v1029
        %1263 = vmatpush.bf16.msra.mxu0 %v1027
        %1264 = vmatpush.bf16.msra.mxu0 %v1025
        %1265 = vmatpush.bf16.msra.mxu0 %v1023
        %1266 = vmatmul.bf16.gmra.mxu0 %v518
        %v1267 = vpop.f32.mrf.mxu0
        %v1268 = vadd.f32 %v1255, %v1267
        %v1269 = vpop.f32.mrf.mxu0
        %1270 = vdwg.mxu0
        %1271 = vmatpush.bf16.msra.mxu0 %v926
        %1272 = vmatpush.bf16.msra.mxu0 %v924
        %1273 = vmatpush.bf16.msra.mxu0 %v922
        %1274 = vmatpush.bf16.msra.mxu0 %v920
        %1275 = vmatpush.bf16.msra.mxu0 %v918
        %1276 = vmatpush.bf16.msra.mxu0 %v916
        %1277 = vmatpush.bf16.msra.mxu0 %v914
        %1278 = vmatpush.bf16.msra.mxu0 %v912
        %1279 = vmatmul.bf16.gmra.mxu0 %v511
        %v1280 = vpop.f32.mrf.mxu0
        %v1281 = vadd.f32 %v496, %v1280
        %v1282 = vpop.f32.mrf.mxu0
        %1283 = vdwg.mxu0
        %1284 = vmatpush.bf16.msra.mxu0 %v942
        %1285 = vmatpush.bf16.msra.mxu0 %v940
        %1286 = vmatpush.bf16.msra.mxu0 %v938
        %1287 = vmatpush.bf16.msra.mxu0 %v936
        %1288 = vmatpush.bf16.msra.mxu0 %v934
        %1289 = vmatpush.bf16.msra.mxu0 %v932
        %1290 = vmatpush.bf16.msra.mxu0 %v930
        %1291 = vmatpush.bf16.msra.mxu0 %v928
        %1292 = vmatmul.bf16.gmra.mxu0 %v512
        %v1293 = vpop.f32.mrf.mxu0
        %v1294 = vadd.f32 %v1281, %v1293
        %v1295 = vpop.f32.mrf.mxu0
        %1296 = vdwg.mxu0
        %1297 = vmatpush.bf16.msra.mxu0 %v958
        %1298 = vmatpush.bf16.msra.mxu0 %v956
        %1299 = vmatpush.bf16.msra.mxu0 %v954
        %1300 = vmatpush.bf16.msra.mxu0 %v952
        %1301 = vmatpush.bf16.msra.mxu0 %v950
        %1302 = vmatpush.bf16.msra.mxu0 %v948
        %1303 = vmatpush.bf16.msra.mxu0 %v946
        %1304 = vmatpush.bf16.msra.mxu0 %v944
        %1305 = vmatmul.bf16.gmra.mxu0 %v513
        %v1306 = vpop.f32.mrf.mxu0
        %v1307 = vadd.f32 %v1294, %v1306
        %v1308 = vpop.f32.mrf.mxu0
        %1309 = vdwg.mxu0
        %1310 = vmatpush.bf16.msra.mxu0 %v974
        %1311 = vmatpush.bf16.msra.mxu0 %v972
        %1312 = vmatpush.bf16.msra.mxu0 %v970
        %1313 = vmatpush.bf16.msra.mxu0 %v968
        %1314 = vmatpush.bf16.msra.mxu0 %v966
        %1315 = vmatpush.bf16.msra.mxu0 %v964
        %1316 = vmatpush.bf16.msra.mxu0 %v962
        %1317 = vmatpush.bf16.msra.mxu0 %v960
        %1318 = vmatmul.bf16.gmra.mxu0 %v514
        %v1319 = vpop.f32.mrf.mxu0
        %v1320 = vadd.f32 %v1307, %v1319
        %v1321 = vpop.f32.mrf.mxu0
        %1322 = vdwg.mxu0
        %1323 = vmatpush.bf16.msra.mxu0 %v990
        %1324 = vmatpush.bf16.msra.mxu0 %v988
        %1325 = vmatpush.bf16.msra.mxu0 %v986
        %1326 = vmatpush.bf16.msra.mxu0 %v984
        %1327 = vmatpush.bf16.msra.mxu0 %v982
        %1328 = vmatpush.bf16.msra.mxu0 %v980
        %1329 = vmatpush.bf16.msra.mxu0 %v978
        %1330 = vmatpush.bf16.msra.mxu0 %v976
        %1331 = vmatmul.bf16.gmra.mxu0 %v515
        %v1332 = vpop.f32.mrf.mxu0
        %v1333 = vadd.f32 %v1320, %v1332
        %v1334 = vpop.f32.mrf.mxu0
        %1335 = vdwg.mxu0
        %1336 = vmatpush.bf16.msra.mxu0 %v1006
        %1337 = vmatpush.bf16.msra.mxu0 %v1004
        %1338 = vmatpush.bf16.msra.mxu0 %v1002
        %1339 = vmatpush.bf16.msra.mxu0 %v1000
        %1340 = vmatpush.bf16.msra.mxu0 %v998
        %1341 = vmatpush.bf16.msra.mxu0 %v996
        %1342 = vmatpush.bf16.msra.mxu0 %v994
        %1343 = vmatpush.bf16.msra.mxu0 %v992
        %1344 = vmatmul.bf16.gmra.mxu0 %v516
        %v1345 = vpop.f32.mrf.mxu0
        %v1346 = vadd.f32 %v1333, %v1345
        %v1347 = vpop.f32.mrf.mxu0
        %1348 = vdwg.mxu0
        %1349 = vmatpush.bf16.msra.mxu0 %v1022
        %1350 = vmatpush.bf16.msra.mxu0 %v1020
        %1351 = vmatpush.bf16.msra.mxu0 %v1018
        %1352 = vmatpush.bf16.msra.mxu0 %v1016
        %1353 = vmatpush.bf16.msra.mxu0 %v1014
        %1354 = vmatpush.bf16.msra.mxu0 %v1012
        %1355 = vmatpush.bf16.msra.mxu0 %v1010
        %1356 = vmatpush.bf16.msra.mxu0 %v1008
        %1357 = vmatmul.bf16.gmra.mxu0 %v517
        %v1358 = vpop.f32.mrf.mxu0
        %v1359 = vadd.f32 %v1346, %v1358
        %v1360 = vpop.f32.mrf.mxu0
        %1361 = vdwg.mxu0
        %1362 = vmatpush.bf16.msra.mxu0 %v1038
        %1363 = vmatpush.bf16.msra.mxu0 %v1036
        %1364 = vmatpush.bf16.msra.mxu0 %v1034
        %1365 = vmatpush.bf16.msra.mxu0 %v1032
        %1366 = vmatpush.bf16.msra.mxu0 %v1030
        %1367 = vmatpush.bf16.msra.mxu0 %v1028
        %1368 = vmatpush.bf16.msra.mxu0 %v1026
        %1369 = vmatpush.bf16.msra.mxu0 %v1024
        %1370 = vmatmul.bf16.gmra.mxu0 %v518
        %v1371 = vpop.f32.mrf.mxu0
        %v1372 = vadd.f32 %v1359, %v1371
        %v1373 = vpop.f32.mrf.mxu0
        %1374 = vdwg.mxu0
        %v1375 = vmax.f32 %v1268, 0.0
        %v1376 = vmax.f32 %v1372, 0.0
        %v1377 = vpack.c.bf16 %v1375, %v1375
        %v1378 = vpack.c.bf16 %v1376, %v1376
        %v1379 = vld [vmem:[#allocation8] sm:$0xf]
        %v1380 = vld [vmem:[#allocation8 + $0x4] sm:$0xf]
        %v1381 = vld [vmem:[#allocation8 + $0x8] sm:$0xf]
        %v1382 = vld [vmem:[#allocation8 + $0xc] sm:$0xf]
        %v1383 = vld [vmem:[#allocation8 + $0x10] sm:$0xf]
        %v1384 = vld [vmem:[#allocation8 + $0x14] sm:$0xf]
        %v1385 = vld [vmem:[#allocation8 + $0x18] sm:$0xf]
        %v1386 = vld [vmem:[#allocation8 + $0x1c] sm:$0xf]
        %v1387 = vld [vmem:[#allocation8 + $0x20] sm:$0xf]
        %v1388 = vld [vmem:[#allocation8 + $0x24] sm:$0xf]
        %v1389 = vld [vmem:[#allocation8 + $0x28] sm:$0xf]
        %v1390 = vld [vmem:[#allocation8 + $0x2c] sm:$0xf]
        %v1391 = vld [vmem:[#allocation8 + $0x30] sm:$0xf]
        %v1392 = vld [vmem:[#allocation8 + $0x34] sm:$0xf]
        %v1393 = vld [vmem:[#allocation8 + $0x38] sm:$0xf]
        %v1394 = vld [vmem:[#allocation8 + $0x3c] sm:$0xf]
        %v1395 = vld [vmem:[#allocation8 + $0x40] sm:$0xf]
        %v1396 = vld [vmem:[#allocation8 + $0x44] sm:$0xf]
        %v1397 = vld [vmem:[#allocation8 + $0x48] sm:$0xf]
        %v1398 = vld [vmem:[#allocation8 + $0x4c] sm:$0xf]
        %v1399 = vld [vmem:[#allocation8 + $0x50] sm:$0xf]
        %v1400 = vld [vmem:[#allocation8 + $0x54] sm:$0xf]
        %v1401 = vld [vmem:[#allocation8 + $0x58] sm:$0xf]
        %v1402 = vld [vmem:[#allocation8 + $0x5c] sm:$0xf]
        %v1403 = vld [vmem:[#allocation8 + $0x60] sm:$0xf]
        %v1404 = vld [vmem:[#allocation8 + $0x64] sm:$0xf]
        %v1405 = vld [vmem:[#allocation8 + $0x68] sm:$0xf]
        %v1406 = vld [vmem:[#allocation8 + $0x6c] sm:$0xf]
        %v1407 = vld [vmem:[#allocation8 + $0x70] sm:$0xf]
        %v1408 = vld [vmem:[#allocation8 + $0x74] sm:$0xf]
        %v1409 = vld [vmem:[#allocation8 + $0x78] sm:$0xf]
        %v1410 = vld [vmem:[#allocation8 + $0x7c] sm:$0xf]
        %v1411 = vld [vmem:[%s4] sm:$0x1]
        %v1413 = vperm.slane %v1411, 0
        %v1447 = vunpack.c.l.b16 %v1379
        %v1448 = vunpack.c.l.b16 %v1380
        %v1449 = vunpack.c.l.b16 %v1381
        %v1450 = vunpack.c.l.b16 %v1382
        %v1451 = vunpack.c.l.b16 %v1383
        %v1452 = vunpack.c.l.b16 %v1384
        %v1453 = vunpack.c.l.b16 %v1385
        %v1454 = vunpack.c.l.b16 %v1386
        %v1455 = vunpack.c.l.b16 %v1387
        %v1456 = vunpack.c.l.b16 %v1388
        %v1457 = vunpack.c.l.b16 %v1389
        %v1458 = vunpack.c.l.b16 %v1390
        %v1459 = vunpack.c.l.b16 %v1391
        %v1460 = vunpack.c.l.b16 %v1392
        %v1461 = vunpack.c.l.b16 %v1393
        %v1462 = vunpack.c.l.b16 %v1394
        %v1463 = vunpack.c.l.b16 %v1395
        %v1464 = vunpack.c.l.b16 %v1396
        %v1465 = vunpack.c.l.b16 %v1397
        %v1466 = vunpack.c.l.b16 %v1398
        %v1467 = vunpack.c.l.b16 %v1399
        %v1468 = vunpack.c.l.b16 %v1400
        %v1469 = vunpack.c.l.b16 %v1401
        %v1470 = vunpack.c.l.b16 %v1402
        %v1471 = vunpack.c.l.b16 %v1403
        %v1472 = vunpack.c.l.b16 %v1404
        %v1473 = vunpack.c.l.b16 %v1405
        %v1474 = vunpack.c.l.b16 %v1406
        %v1475 = vunpack.c.l.b16 %v1407
        %v1476 = vunpack.c.l.b16 %v1408
        %v1477 = vunpack.c.l.b16 %v1409
        %v1478 = vunpack.c.l.b16 %v1410
        %v1479 = vpack.c.b16 %v1448, %v1447
        %v1480 = vpack.c.b16 %v1450, %v1449
        %v1481 = vpack.c.b16 %v1452, %v1451
        %v1482 = vpack.c.b16 %v1454, %v1453
        %v1483 = vpack.c.b16 %v1456, %v1455
        %v1484 = vpack.c.b16 %v1458, %v1457
        %v1485 = vpack.c.b16 %v1460, %v1459
        %v1486 = vpack.c.b16 %v1462, %v1461
        %v1487 = vpack.c.b16 %v1464, %v1463
        %v1488 = vpack.c.b16 %v1466, %v1465
        %v1489 = vpack.c.b16 %v1468, %v1467
        %v1490 = vpack.c.b16 %v1470, %v1469
        %v1491 = vpack.c.b16 %v1472, %v1471
        %v1492 = vpack.c.b16 %v1474, %v1473
        %v1493 = vpack.c.b16 %v1476, %v1475
        %v1494 = vpack.c.b16 %v1478, %v1477
        %1511 = vmatpush.bf16.msra.mxu0 %v1486
        %1512 = vmatpush.bf16.msra.mxu0 %v1485
        %1513 = vmatpush.bf16.msra.mxu0 %v1484
        %1514 = vmatpush.bf16.msra.mxu0 %v1483
        %1515 = vmatpush.bf16.msra.mxu0 %v1482
        %1516 = vmatpush.bf16.msra.mxu0 %v1481
        %1517 = vmatpush.bf16.msra.mxu0 %v1480
        %1518 = vmatpush.bf16.msra.mxu0 %v1479
        %1519 = vmatmul.bf16.gmra.mxu0 %v1377
        %v1520 = vpop.f32.mrf.mxu0
        %v1521 = vadd.f32 %v1413, %v1520
        %v1522 = vpop.f32.mrf.mxu0
        %1523 = vdwg.mxu0
        %1524 = vmatpush.bf16.msra.mxu0 %v1494
        %1525 = vmatpush.bf16.msra.mxu0 %v1493
        %1526 = vmatpush.bf16.msra.mxu0 %v1492
        %1527 = vmatpush.bf16.msra.mxu0 %v1491
        %1528 = vmatpush.bf16.msra.mxu0 %v1490
        %1529 = vmatpush.bf16.msra.mxu0 %v1489
        %1530 = vmatpush.bf16.msra.mxu0 %v1488
        %1531 = vmatpush.bf16.msra.mxu0 %v1487
        %1532 = vmatmul.bf16.gmra.mxu0 %v1378
        %v1533 = vpop.f32.mrf.mxu0
        %v1534 = vadd.f32 %v1521, %v1533
        %v1535 = vpop.f32.mrf.mxu0
        %1536 = vdwg.mxu0
        %v1537 = vmax.f32 %v1534, 0.0
        %v1538 = vpack.c.bf16 %v1537, %v1537
        %v1539 = vld [vmem:[#allocation10] sm:$0xf]
        %v1540 = vld [vmem:[#allocation10 + $0x4] sm:$0xf]
        %v1541 = vld [vmem:[#allocation10 + $0x8] sm:$0xf]
        %v1542 = vld [vmem:[#allocation10 + $0xc] sm:$0xf]
        %v1543 = vld [vmem:[#allocation10 + $0x10] sm:$0xf]
        %v1544 = vld [vmem:[#allocation10 + $0x14] sm:$0xf]
        %v1545 = vld [vmem:[#allocation10 + $0x18] sm:$0xf]
        %v1546 = vld [vmem:[#allocation10 + $0x1c] sm:$0xf]
        %v1547 = vld [vmem:[#allocation10 + $0x20] sm:$0xf]
        %v1548 = vld [vmem:[#allocation10 + $0x24] sm:$0xf]
        %v1549 = vld [vmem:[#allocation10 + $0x28] sm:$0xf]
        %v1550 = vld [vmem:[#allocation10 + $0x2c] sm:$0xf]
        %v1551 = vld [vmem:[#allocation10 + $0x30] sm:$0xf]
        %v1552 = vld [vmem:[#allocation10 + $0x34] sm:$0xf]
        %v1553 = vld [vmem:[#allocation10 + $0x38] sm:$0xf]
        %v1554 = vld [vmem:[#allocation10 + $0x3c] sm:$0xf]
        %v1555 = vld [vmem:[%s6] sm:$0x1]
        %v1557 = vperm.slane %v1555, 0
        %v1575 = vunpack.c.l.b16 %v1539
        %v1576 = vunpack.c.l.b16 %v1540
        %v1577 = vunpack.c.l.b16 %v1541
        %v1578 = vunpack.c.l.b16 %v1542
        %v1579 = vunpack.c.l.b16 %v1543
        %v1580 = vunpack.c.l.b16 %v1544
        %v1581 = vunpack.c.l.b16 %v1545
        %v1582 = vunpack.c.l.b16 %v1546
        %v1583 = vunpack.c.l.b16 %v1547
        %v1584 = vunpack.c.l.b16 %v1548
        %v1585 = vunpack.c.l.b16 %v1549
        %v1586 = vunpack.c.l.b16 %v1550
        %v1587 = vunpack.c.l.b16 %v1551
        %v1588 = vunpack.c.l.b16 %v1552
        %v1589 = vunpack.c.l.b16 %v1553
        %v1590 = vunpack.c.l.b16 %v1554
        %v1591 = vpack.c.b16 %v1576, %v1575
        %v1592 = vpack.c.b16 %v1578, %v1577
        %v1593 = vpack.c.b16 %v1580, %v1579
        %v1594 = vpack.c.b16 %v1582, %v1581
        %v1595 = vpack.c.b16 %v1584, %v1583
        %v1596 = vpack.c.b16 %v1586, %v1585
        %v1597 = vpack.c.b16 %v1588, %v1587
        %v1598 = vpack.c.b16 %v1590, %v1589
        %1607 = vmatpush.bf16.msra.mxu0 %v1598
        %1608 = vmatpush.bf16.msra.mxu0 %v1597
        %1609 = vmatpush.bf16.msra.mxu0 %v1596
        %1610 = vmatpush.bf16.msra.mxu0 %v1595
        %1611 = vmatpush.bf16.msra.mxu0 %v1594
        %1612 = vmatpush.bf16.msra.mxu0 %v1593
        %1613 = vmatpush.bf16.msra.mxu0 %v1592
        %1614 = vmatpush.bf16.msra.mxu0 %v1591
        %1615 = vmatmul.bf16.gmra.mxu0 %v1538
        %v1616 = vpop.f32.mrf.mxu0
        %v1617 = vadd.f32 %v1557, %v1616
        %v1618 = vpop.f32.mrf.mxu0
        %1619 = vdwg.mxu0
        %1620 = vmax.xlane.f32.xlu0 %v1617
        %v1621 = vpop.xlane.xlu0 %1620
        %v1622 = vsub.f32 %v1617, %v1621
        %v1623 = vmul.f32 %v1622, 1.442695
        %v1624 = vpow.pop %v1623
        %1625 = vadd.xlane.f32.xlu0 %v1624
        %v1626 = vpop.xlane.xlu0 %1625
        %v1627 = vrcp.pop %v1626
        %v1628 = vmul.f32 %v1626, %v1627
        %v1629 = vsub.f32 1.0, %v1628
        %v1630 = vmul.f32 %v1627, %v1629
        %v1631 = vadd.f32 %v1627, %v1630
        %vm1632 = vweird.f32 %v1626
        %vm1633 = vweird.f32 %v1627
        %vm1634 = vmor %vm1632, %vm1633
        %v1635 = vsel %vm1634, %v1627, %v1631
        %v1636 = vand.u32 2147483647, %v1626
        %vm1637 = vcmp.eq.f32.partialorder %v1636, 8.507059e+37
        %v1638 = vand.u32 %v1626, 2147483648
        %v1639 = vor.u32 1.1754944e-38, %v1638
        %v1640 = vsel %vm1637, %v1639, %v1635
        %v1641 = vmul.f32 %v1624, %v1640
        %1642 = vst [vmem:[%s360] sm:$0xff] %v1641
        %s1643 = sand.u32 %s186, 1
        %s1644 = scalar_lea.sflag [#allocation4], %s1643
        %s1645 = sand.u32 %s186, 1
        %s1646 = smul.addr %s1645, 8
        %s1647 = scalar_lea.vmem [#allocation11], %s1646
        // Predicated region
        $region69: #{tpu_custom_call.1} parent=47 // pred_check
          %p1648 = pneg %p196
        $region70: #{tpu_custom_call.1} parent=47 // pred_check_branch
          %1650 = sbr.rel (%p1648) target = $region72
        $region71: #{tpu_custom_call.1} parent=47 // pred_region
          %1652 = vsyncadd %s1644, 0
          %s1653 = smul.addr %s26, 8
          %s1654 = scalar_lea.hbm %s7, %s1653
          %s1656 = sshll.u32 %s1647, 4
          %s1657 = int_to_ptr.vmem [resolvable:$true] %s1656
          %s1658 = sshll.u32 %s1654, 4
          %s1659 = int_to_ptr.hbm [resolvable:$true] %s1658
          %1661 = dma.vmem_to_hbm [thread:$0]  %s1657, 128, %s1659, %s1644
        $region72: #{tpu_custom_call.1} parent=47 // pred_fallthru
          _
      $region48: #{tpu_custom_call.1} parent=5 // pred_fallthru
        _
      %p1662 = scmp.le.s32.totalorder 2, %s21
      // Predicated region
      $region73: #{tpu_custom_call.1} parent=5 // pred_check
        %p1663 = pneg %p1662
      $region74: #{tpu_custom_call.1} parent=5 // pred_check_branch
        %1665 = sbr.rel (%p1663) target = $region76
      $region75: #{tpu_custom_call.1} parent=5 // pred_region
        %s1666 = ssub.s32 %s21, 2
        // Predicated region
        $region77: #{tpu_custom_call.1} parent=75 // pred_check
          %p1667 = pneg %p202
        $region78: #{tpu_custom_call.1} parent=75 // pred_check_branch
          %1669 = sbr.rel (%p1667) target = $region80
        $region79: #{tpu_custom_call.1} parent=75 // pred_region
          %s1670 = sand.u32 %s187, 1
          %s1671 = scalar_lea.sflag [#allocation4], %s1670
          %s1672 = sand.u32 %s187, 1
          %s1673 = smul.addr %s1672, 8
          %s1674 = scalar_lea.vmem [#allocation11], %s1673
          %1676 = dma.done %s1671, 128
        $region80: #{tpu_custom_call.1} parent=75 // pred_fallthru
          _
      $region76: #{tpu_custom_call.1} parent=5 // pred_fallthru
        _
    $region6: #{tpu_custom_call.1} parent=1 // loop_footer
      %s25 = sadd.s32 1, %s21
    $region7: #{tpu_custom_call.1} parent=1 // loop_footer_branch
      %20 = sbr.rel target = $region3
    $region8: #{tpu_custom_call.1} parent=1 // loop_exit
      _
    %1677 = vsyncpa [#allocation3], 1
    %s1678 = scalar_lea.sflag [#allocation3], 1
    %1679 = vsyncpa %s1678, 1
    %1680 = vsyncpa [#allocation6], 1
    %1681 = vsyncpa [#allocation9], 1
    %1682 = vsyncpa [#allocation4], 1
    %s1683 = scalar_lea.sflag [#allocation4], 1
    %1684 = vsyncpa %s1683, 1

// kernel: tpu_custom_call.1
$region0: #{tpu_custom_call.1}
  #allocation0 [shape = 'u32[]', space=smem, size = 0x4, offset = 0x4, fixed_abs, tag = 'smem constant byte address 0x4 - core index']
  #allocation1 [shape = 'u32[72,128]{1,0:T(1,128)}', space=vmem, size = 0x9000, scoped, tag = 'internal scratch']
  %s0 = inlined_call_operand.hbm [shape: bf16[16,1024], index: 0, kind: input, shape index: {}]
  %s1 = inlined_call_operand.hbm [shape: bf16[1024,256], index: 1, kind: input, shape index: {}]
  %s2 = inlined_call_operand.hbm [shape: f32[1,256], index: 2, kind: input, shape index: {}]
  %s3 = inlined_call_operand.hbm [shape: bf16[256,128], index: 3, kind: input, shape index: {}]
  %s4 = inlined_call_operand.vmem [shape: f32[1,128], index: 4, kind: input, shape index: {}]
  %s5 = inlined_call_operand.hbm [shape: bf16[128,128], index: 5, kind: input, shape index: {}]
  %s6 = inlined_call_operand.vmem [shape: f32[1,128], index: 6, kind: input, shape index: {}]
  %s7 = inlined_call_operand.hbm [shape: f32[16,128], index: 7, kind: output, shape index: {}]
  %s8 = sld [smem:[#allocation0]]
  $region81: #{tpu_custom_call.1} parent=0
    _
  %s10 = ssub.s32 1, %s8
  %s11 = scalar_select 0, %s10, %s8
  $region1: #{tpu_custom_call.1} parent=0
    #allocation2 [shape = 'u8[32768]{0}', space=vmem, size = 0x8000, scoped, tag = 'input window, operand 0']
    #allocation3 [shape = 's32[2]{0}', space=sflag, size = 0x8, scoped, tag = 'scoped memory for tpu_custom_call.1']
    #allocation4 [shape = 's32[2]{0}', space=sflag, size = 0x8, scoped, tag = 'scoped memory for tpu_custom_call.1']
    #allocation5 [shape = 'u8[524288]{0}', space=vmem, size = 0x80000, scoped, tag = 'input window, operand 1, single buffered']
    #allocation6 [shape = 's32[1]{0}', space=sflag, size = 0x4, scoped, tag = 'scoped memory for tpu_custom_call.1']
    #allocation7 [shape = 'u8[1024]{0}', space=vmem, size = 0x400, scoped, tag = 'input window, operand 2, single buffered']
    #allocation8 [shape = 'u8[65536]{0}', space=vmem, size = 0x10000, scoped, tag = 'input window, operand 3, single buffered']
    #allocation9 [shape = 's32[1]{0}', space=sflag, size = 0x4, scoped, tag = 'scoped memory for tpu_custom_call.1']
    #allocation10 [shape = 'u8[32768]{0}', space=vmem, size = 0x8000, scoped, tag = 'input window, operand 5, single buffered']
    #allocation11 [shape = 'u8[8192]{0}', space=vmem, size = 0x2000, scoped, tag = 'output window, operand 0']
    %12 = vsyncpa [#allocation3], 0
    %s13 = scalar_lea.sflag [#allocation3], 1
    %14 = vsyncpa %s13, 0
    %15 = vsyncpa [#allocation6], 0
    %16 = vsyncpa [#allocation9], 0
    %17 = vsyncpa [#allocation4], 0
    %s18 = scalar_lea.sflag [#allocation4], 1
    %19 = vsyncpa %s18, 0
    loop: start=0, step=1, limit=4
    $region2: #{tpu_custom_call.1} parent=1 // loop_pre_header
      _
    $region3: #{tpu_custom_call.1} parent=1 // loop_header
      %s21 = sphi 0, %s25
      %p22 = scmp.ge.s32.totalorder %s21, 4
      %s31 = sphi 0, %s33
      %s34 = sphi 0, %s31
      %s35 = sphi 0, %s34
      %s51 = sphi 0, %s35
      %s55 = sphi 0, %s55
      %s57 = sphi 0, %s55
      %s58 = sphi 0, %s57
      %s72 = sphi 0, %s58
      %s76 = sphi 0, %s76
      %s78 = sphi 0, %s76
      %s79 = sphi 0, %s78
      %s93 = sphi 0, %s79
      %s97 = sphi 0, %s97
      %s99 = sphi 0, %s97
      %s100 = sphi 0, %s99
      %s114 = sphi 0, %s100
      %s118 = sphi 0, %s118
      %s120 = sphi 0, %s118
      %s121 = sphi 0, %s120
      %s135 = sphi 0, %s121
      %s139 = sphi 0, %s139
      %s141 = sphi 0, %s139
      %s142 = sphi 0, %s141
      %s156 = sphi 0, %s142
      %s160 = sphi 0, %s160
      %s162 = sphi 0, %s160
      %s163 = sphi 0, %s162
      %s177 = sphi 0, %s163
      %s183 = sphi 0, %s185
      %s186 = sphi 0, %s183
      %s187 = sphi 0, %s186
      %s203 = sphi 0, %s187
    $region4: #{tpu_custom_call.1} parent=1 // loop_header_branch
      %24 = sbr.rel (%p22) target = $region8
    $region5: #{tpu_custom_call.1} parent=1 // loop_body
      %s26 = ssub.s32 %s21, 1
      %s27 = ssub.s32 %s21, 2
      %s28 = sadd.s32 %s21, 1
      %s29 = ssub.s32 %s21, %s28
      %p30 = scmp.eq.s32.totalorder %s29, 0
      %s32 = sadd.s32 %s31, 1
      %s33 = scalar_select %p30, %s31, %s32
      %p36 = pneg %p30
      %p37 = scmp.eq.s32.totalorder %s21, 1
      %p38 = por %p36, %p37
      %p39 = scmp.ne.s32.totalorder %s31, %s34
      %p40 = scmp.eq.s32.totalorder %s21, 0
      %p41 = por %p39, %p40
      %p42 = scmp.ne.s32.totalorder %s31, %s34
      %p43 = scmp.eq.s32.totalorder %s26, 1
      %p44 = por %p42, %p43
      %p45 = scmp.ne.s32.totalorder %s34, %s35
      %p46 = scmp.eq.s32.totalorder %s26, 0
      %p47 = por %p45, %p46
      %p48 = scmp.ne.s32.totalorder %s34, %s35
      %p49 = scmp.eq.s32.totalorder %s27, 1
      %p50 = por %p48, %p49
      %p52 = scmp.ne.s32.totalorder %s35, %s51
      %p53 = scmp.eq.s32.totalorder %s27, 0
      %p54 = por %p52, %p53
      %s56 = sadd.s32 %s55, 1
      %p59 = scmp.eq.s32.totalorder %s21, 1
      %p60 = scmp.ne.s32.totalorder %s55, %s57
      %p61 = scmp.eq.s32.totalorder %s21, 0
      %p62 = por %p60, %p61
      %p63 = scmp.ne.s32.totalorder %s55, %s57
      %p64 = scmp.eq.s32.totalorder %s26, 1
      %p65 = por %p63, %p64
      %p66 = scmp.ne.s32.totalorder %s57, %s58
      %p67 = scmp.eq.s32.totalorder %s26, 0
      %p68 = por %p66, %p67
      %p69 = scmp.ne.s32.totalorder %s57, %s58
      %p70 = scmp.eq.s32.totalorder %s27, 1
      %p71 = por %p69, %p70
      %p73 = scmp.ne.s32.totalorder %s58, %s72
      %p74 = scmp.eq.s32.totalorder %s27, 0
      %p75 = por %p73, %p74
      %s77 = sadd.s32 %s76, 1
      %p80 = scmp.eq.s32.totalorder %s21, 1
      %p81 = scmp.ne.s32.totalorder %s76, %s78
      %p82 = scmp.eq.s32.totalorder %s21, 0
      %p83 = por %p81, %p82
      %p84 = scmp.ne.s32.totalorder %s76, %s78
      %p85 = scmp.eq.s32.totalorder %s26, 1
      %p86 = por %p84, %p85
      %p87 = scmp.ne.s32.totalorder %s78, %s79
      %p88 = scmp.eq.s32.totalorder %s26, 0
      %p89 = por %p87, %p88
      %p90 = scmp.ne.s32.totalorder %s78, %s79
      %p91 = scmp.eq.s32.totalorder %s27, 1
      %p92 = por %p90, %p91
      %p94 = scmp.ne.s32.totalorder %s79, %s93
      %p95 = scmp.eq.s32.totalorder %s27, 0
      %p96 = por %p94, %p95
      %s98 = sadd.s32 %s97, 1
      %p101 = scmp.eq.s32.totalorder %s21, 1
      %p102 = scmp.ne.s32.totalorder %s97, %s99
      %p103 = scmp.eq.s32.totalorder %s21, 0
      %p104 = por %p102, %p103
      %p105 = scmp.ne.s32.totalorder %s97, %s99
      %p106 = scmp.eq.s32.totalorder %s26, 1
      %p107 = por %p105, %p106
      %p108 = scmp.ne.s32.totalorder %s99, %s100
      %p109 = scmp.eq.s32.totalorder %s26, 0
      %p110 = por %p108, %p109
      %p111 = scmp.ne.s32.totalorder %s99, %s100
      %p112 = scmp.eq.s32.totalorder %s27, 1
      %p113 = por %p111, %p112
      %p115 = scmp.ne.s32.totalorder %s100, %s114
      %p116 = scmp.eq.s32.totalorder %s27, 0
      %p117 = por %p115, %p116
      %s119 = sadd.s32 %s118, 1
      %p122 = scmp.eq.s32.totalorder %s21, 1
      %p123 = scmp.ne.s32.totalorder %s118, %s120
      %p124 = scmp.eq.s32.totalorder %s21, 0
      %p125 = por %p123, %p124
      %p126 = scmp.ne.s32.totalorder %s118, %s120
      %p127 = scmp.eq.s32.totalorder %s26, 1
      %p128 = por %p126, %p127
      %p129 = scmp.ne.s32.totalorder %s120, %s121
      %p130 = scmp.eq.s32.totalorder %s26, 0
      %p131 = por %p129, %p130
      %p132 = scmp.ne.s32.totalorder %s120, %s121
      %p133 = scmp.eq.s32.totalorder %s27, 1
      %p134 = por %p132, %p133
      %p136 = scmp.ne.s32.totalorder %s121, %s135
      %p137 = scmp.eq.s32.totalorder %s27, 0
      %p138 = por %p136, %p137
      %s140 = sadd.s32 %s139, 1
      %p143 = scmp.eq.s32.totalorder %s21, 1
      %p144 = scmp.ne.s32.totalorder %s139, %s141
      %p145 = scmp.eq.s32.totalorder %s21, 0
      %p146 = por %p144, %p145
      %p147 = scmp.ne.s32.totalorder %s139, %s141
      %p148 = scmp.eq.s32.totalorder %s26, 1
      %p149 = por %p147, %p148
      %p150 = scmp.ne.s32.totalorder %s141, %s142
      %p151 = scmp.eq.s32.totalorder %s26, 0
      %p152 = por %p150, %p151
      %p153 = scmp.ne.s32.totalorder %s141, %s142
      %p154 = scmp.eq.s32.totalorder %s27, 1
      %p155 = por %p153, %p154
      %p157 = scmp.ne.s32.totalorder %s142, %s156
      %p158 = scmp.eq.s32.totalorder %s27, 0
      %p159 = por %p157, %p158
      %s161 = sadd.s32 %s160, 1
      %p164 = scmp.eq.s32.totalorder %s21, 1
      %p165 = scmp.ne.s32.totalorder %s160, %s162
      %p166 = scmp.eq.s32.totalorder %s21, 0
      %p167 = por %p165, %p166
      %p168 = scmp.ne.s32.totalorder %s160, %s162
      %p169 = scmp.eq.s32.totalorder %s26, 1
      %p170 = por %p168, %p169
      %p171 = scmp.ne.s32.totalorder %s162, %s163
      %p172 = scmp.eq.s32.totalorder %s26, 0
      %p173 = por %p171, %p172
      %p174 = scmp.ne.s32.totalorder %s162, %s163
      %p175 = scmp.eq.s32.totalorder %s27, 1
      %p176 = por %p174, %p175
      %p178 = scmp.ne.s32.totalorder %s163, %s177
      %p179 = scmp.eq.s32.totalorder %s27, 0
      %p180 = por %p178, %p179
      %s181 = ssub.s32 %s21, %s28
      %p182 = scmp.eq.s32.totalorder %s181, 0
      %s184 = sadd.s32 %s183, 1
      %s185 = scalar_select %p182, %s183, %s184
      %p188 = pneg %p182
      %p189 = scmp.eq.s32.totalorder %s21, 1
      %p190 = por %p188, %p189
      %p191 = scmp.ne.s32.totalorder %s183, %s186
      %p192 = scmp.eq.s32.totalorder %s21, 0
      %p193 = por %p191, %p192
      %p194 = scmp.ne.s32.totalorder %s183, %s186
      %p195 = scmp.eq.s32.totalorder %s26, 1
      %p196 = por %p194, %p195
      %p197 = scmp.ne.s32.totalorder %s186, %s187
      %p198 = scmp.eq.s32.totalorder %s26, 0
      %p199 = por %p197, %p198
      %p200 = scmp.ne.s32.totalorder %s186, %s187
      %p201 = scmp.eq.s32.totalorder %s27, 1
      %p202 = por %p200, %p201
      %p204 = scmp.ne.s32.totalorder %s187, %s203
      %p205 = scmp.eq.s32.totalorder %s27, 0
      %p206 = por %p204, %p205
      %p207 = scmp.le.s32.totalorder 1, %s21
      %p208 = scmp.lt.s32.totalorder %s21, 3
      %p209 = pnand %p207, %p208
      %p210 = pneg %p209
      // Predicated region
      $region9: #{tpu_custom_call.1} parent=5 // pred_check
        _
      $region10: #{tpu_custom_call.1} parent=5 // pred_check_branch
        %212 = sbr.rel (%p209) target = $region12
      $region11: #{tpu_custom_call.1} parent=5 // pred_region
        %s213 = ssub.s32 %s21, 1
        // Predicated region
        $region13: #{tpu_custom_call.1} parent=11 // pred_check
          %p214 = pneg %p68
        $region14: #{tpu_custom_call.1} parent=11 // pred_check_branch
          %216 = sbr.rel (%p214) target = $region16
        $region15: #{tpu_custom_call.1} parent=11 // pred_region
          %218 = vsyncadd [#allocation6], 0
          %s219 = sshll.u32 %s1, 4
          %s220 = int_to_ptr.hbm [resolvable:$true] %s219
          %s221 = sshll.u32 [#allocation5], 4
          %s222 = int_to_ptr.vmem [resolvable:$true] %s221
          %227 = dma.hbm_to_vmem [thread:$0]  %s220, 16384, %s222, [#allocation6], 128, 128, 8
        $region16: #{tpu_custom_call.1} parent=11 // pred_fallthru
          _
        // Predicated region
        $region17: #{tpu_custom_call.1} parent=11 // pred_check
          %p228 = pneg %p89
        $region18: #{tpu_custom_call.1} parent=11 // pred_check_branch
          %230 = sbr.rel (%p228) target = $region20
        $region19: #{tpu_custom_call.1} parent=11 // pred_region
          %232 = vsyncadd [#allocation6], 0
          %s234 = sshll.u32 %s2, 4
          %s235 = int_to_ptr.hbm [resolvable:$true] %s234
          %s236 = sshll.u32 [#allocation7], 4
          %s237 = int_to_ptr.vmem [resolvable:$true] %s236
          %239 = dma.hbm_to_vmem [thread:$0]  %s235, 32, %s237, [#allocation6]
        $region20: #{tpu_custom_call.1} parent=11 // pred_fallthru
          _
        // Predicated region
        $region21: #{tpu_custom_call.1} parent=11 // pred_check
          %p240 = pneg %p110
        $region22: #{tpu_custom_call.1} parent=11 // pred_check_branch
          %242 = sbr.rel (%p240) target = $region24
        $region23: #{tpu_custom_call.1} parent=11 // pred_region
          %244 = vsyncadd [#allocation9], 0
          %s245 = sshll.u32 %s3, 4
          %s246 = int_to_ptr.hbm [resolvable:$true] %s245
          %s247 = sshll.u32 [#allocation8], 4
          %s248 = int_to_ptr.vmem [resolvable:$true] %s247
          %253 = dma.hbm_to_vmem [thread:$0]  %s246, 2048, %s248, [#allocation9], 64, 64, 4
        $region24: #{tpu_custom_call.1} parent=11 // pred_fallthru
          _
        // Predicated region
        $region25: #{tpu_custom_call.1} parent=11 // pred_check
          %p254 = pneg %p131
        $region26: #{tpu_custom_call.1} parent=11 // pred_check_branch
          %256 = sbr.rel (%p254) target = $region28
        $region27: #{tpu_custom_call.1} parent=11 // pred_region
          _
        $region28: #{tpu_custom_call.1} parent=11 // pred_fallthru
          _
        // Predicated region
        $region29: #{tpu_custom_call.1} parent=11 // pred_check
          %p257 = pneg %p152
        $region30: #{tpu_custom_call.1} parent=11 // pred_check_branch
          %259 = sbr.rel (%p257) target = $region32
        $region31: #{tpu_custom_call.1} parent=11 // pred_region
          %261 = vsyncadd [#allocation9], 0
          %s262 = sshll.u32 %s5, 4
          %s263 = int_to_ptr.hbm [resolvable:$true] %s262
          %s264 = sshll.u32 [#allocation10], 4
          %s265 = int_to_ptr.vmem [resolvable:$true] %s264
          %270 = dma.hbm_to_vmem [thread:$0]  %s263, 1024, %s265, [#allocation9], 64, 64, 4
        $region32: #{tpu_custom_call.1} parent=11 // pred_fallthru
          _
        // Predicated region
        $region33: #{tpu_custom_call.1} parent=11 // pred_check
          %p271 = pneg %p173
        $region34: #{tpu_custom_call.1} parent=11 // pred_check_branch
          %273 = sbr.rel (%p271) target = $region36
        $region35: #{tpu_custom_call.1} parent=11 // pred_region
          _
        $region36: #{tpu_custom_call.1} parent=11 // pred_fallthru
          _
      $region12: #{tpu_custom_call.1} parent=5 // pred_fallthru
        _
      %p274 = scmp.lt.s32.totalorder %s21, 2
      // Predicated region
      $region37: #{tpu_custom_call.1} parent=5 // pred_check
        %p275 = pneg %p274
      $region38: #{tpu_custom_call.1} parent=5 // pred_check_branch
        %277 = sbr.rel (%p275) target = $region40
      $region39: #{tpu_custom_call.1} parent=5 // pred_region
        // Predicated region
        $region41: #{tpu_custom_call.1} parent=39 // pred_check
          %p278 = pneg %p41
        $region42: #{tpu_custom_call.1} parent=39 // pred_check_branch
          %280 = sbr.rel (%p278) target = $region44
        $region43: #{tpu_custom_call.1} parent=39 // pred_region
          %s281 = sand.u32 %s31, 1
          %s282 = scalar_lea.sflag [#allocation3], %s281
          %s283 = sand.u32 %s31, 1
          %s284 = smul.addr %s283, 32
          %s285 = scalar_lea.vmem [#allocation2], %s284
          %287 = vsyncadd %s282, 0
          %s288 = smul.addr %s21, 8
          %s289 = smul.addr %s288, 4
          %s290 = scalar_lea.hbm %s0, %s289
          %s292 = sshll.u32 %s290, 4
          %s293 = int_to_ptr.hbm [resolvable:$true] %s292
          %s294 = sshll.u32 %s285, 4
          %s295 = int_to_ptr.vmem [resolvable:$true] %s294
          %297 = dma.hbm_to_vmem [thread:$0]  %s293, 512, %s295, %s282
        $region44: #{tpu_custom_call.1} parent=39 // pred_fallthru
          _
      $region40: #{tpu_custom_call.1} parent=5 // pred_fallthru
        _
      %p298 = scmp.le.s32.totalorder 1, %s21
      %p299 = scmp.lt.s32.totalorder %s21, 3
      %p300 = pnand %p298, %p299
      %p301 = pneg %p300
      // Predicated region
      $region45: #{tpu_custom_call.1} parent=5 // pred_check
        _
      $region46: #{tpu_custom_call.1} parent=5 // pred_check_branch
        %303 = sbr.rel (%p300) target = $region48
      $region47: #{tpu_custom_call.1} parent=5 // pred_region
        %s304 = ssub.s32 %s21, 1
        %s305 = sand.u32 %s34, 1
        %s306 = scalar_lea.sflag [#allocation3], %s305
        %s307 = sand.u32 %s34, 1
        %s308 = smul.addr %s307, 32
        %s309 = scalar_lea.vmem [#allocation2], %s308
        // Predicated region
        $region49: #{tpu_custom_call.1} parent=47 // pred_check
          %p310 = pneg %p47
        $region50: #{tpu_custom_call.1} parent=47 // pred_check_branch
          %312 = sbr.rel (%p310) target = $region52
        $region51: #{tpu_custom_call.1} parent=47 // pred_region
          %314 = dma.done %s306, 512
        $region52: #{tpu_custom_call.1} parent=47 // pred_fallthru
          _
        // Predicated region
        $region53: #{tpu_custom_call.1} parent=47 // pred_check
          %p315 = pneg %p68
        $region54: #{tpu_custom_call.1} parent=47 // pred_check_branch
          %317 = sbr.rel (%p315) target = $region56
        $region55: #{tpu_custom_call.1} parent=47 // pred_region
          %319 = dma.done [#allocation6], 16384
        $region56: #{tpu_custom_call.1} parent=47 // pred_fallthru
          _
        // Predicated region
        $region57: #{tpu_custom_call.1} parent=47 // pred_check
          %p320 = pneg %p89
        $region58: #{tpu_custom_call.1} parent=47 // pred_check_branch
          %322 = sbr.rel (%p320) target = $region60
        $region59: #{tpu_custom_call.1} parent=47 // pred_region
          %324 = dma.done [#allocation6], 32
        $region60: #{tpu_custom_call.1} parent=47 // pred_fallthru
          _
        // Predicated region
        $region61: #{tpu_custom_call.1} parent=47 // pred_check
          %p325 = pneg %p110
        $region62: #{tpu_custom_call.1} parent=47 // pred_check_branch
          %327 = sbr.rel (%p325) target = $region64
        $region63: #{tpu_custom_call.1} parent=47 // pred_region
          %329 = dma.done [#allocation9], 2048
        $region64: #{tpu_custom_call.1} parent=47 // pred_fallthru
          _
        // Predicated region
        $region65: #{tpu_custom_call.1} parent=47 // pred_check
          %p330 = pneg %p152
        $region66: #{tpu_custom_call.1} parent=47 // pred_check_branch
          %332 = sbr.rel (%p330) target = $region68
        $region67: #{tpu_custom_call.1} parent=47 // pred_region
          %334 = dma.done [#allocation9], 1024
        $region68: #{tpu_custom_call.1} parent=47 // pred_fallthru
          _
        %s335 = sand.u32 %s34, 1
        %s336 = scalar_lea.sflag [#allocation3], %s335
        %s337 = sand.u32 %s34, 1
        %s338 = smul.addr %s337, 32
        %s339 = scalar_lea.vmem [#allocation2], %s338
        %p340 = pneg %p47
        %p341 = pneg %p44
        %p342 = pneg %p68
        %p343 = pneg %p65
        %p344 = pneg %p89
        %p345 = pneg %p86
        %p346 = pneg %p110
        %p347 = pneg %p107
        %p348 = pneg %p131
        %p349 = pneg %p128
        %p350 = pneg %p152
        %p351 = pneg %p149
        %p352 = pneg %p173
        %p353 = pneg %p170
        %p354 = pneg %p199
        %p355 = pneg %p196
        %s356 = sand.u32 %s186, 1
        %s357 = scalar_lea.sflag [#allocation4], %s356
        %s358 = sand.u32 %s186, 1
        %s359 = smul.addr %s358, 8
        %s360 = scalar_lea.vmem [#allocation11], %s359
        %v361 = vld [vmem:[%s309] sm:$0xff]
        %v362 = vld [vmem:[%s309 + $0x8] sm:$0xff]
        %v363 = vld [vmem:[%s309 + $0x10] sm:$0xff]
        %v364 = vld [vmem:[%s309 + $0x18] sm:$0xff]
        %v365 = vld [vmem:[#allocation5] sm:$0xff]
        %v366 = vld [vmem:[#allocation5 + $0x8] sm:$0xff]
        %v367 = vld [vmem:[#allocation5 + $0x10] sm:$0xff]
        %v368 = vld [vmem:[#allocation5 + $0x18] sm:$0xff]
        %v369 = vld [vmem:[#allocation5 + $0x20] sm:$0xff]
        %v370 = vld [vmem:[#allocation5 + $0x28] sm:$0xff]
        %v371 = vld [vmem:[#allocation5 + $0x30] sm:$0xff]
        %v372 = vld [vmem:[#allocation5 + $0x38] sm:$0xff]
        %v373 = vld [vmem:[#allocation5 + $0x40] sm:$0xff]
        %v374 = vld [vmem:[#allocation5 + $0x48] sm:$0xff]
        %v375 = vld [vmem:[#allocation5 + $0x50] sm:$0xff]
        %v376 = vld [vmem:[#allocation5 + $0x58] sm:$0xff]
        %v377 = vld [vmem:[#allocation5 + $0x60] sm:$0xff]
        %v378 = vld [vmem:[#allocation5 + $0x68] sm:$0xff]
        %v379 = vld [vmem:[#allocation5 + $0x70] sm:$0xff]
        %v380 = vld [vmem:[#allocation5 + $0x78] sm:$0xff]
        %v381 = vld [vmem:[#allocation5 + $0x80] sm:$0xff]
        %v382 = vld [vmem:[#allocation5 + $0x88] sm:$0xff]
        %v383 = vld [vmem:[#allocation5 + $0x90] sm:$0xff]
        %v384 = vld [vmem:[#allocation5 + $0x98] sm:$0xff]
        %v385 = vld [vmem:[#allocation5 + $0xa0] sm:$0xff]
        %v386 = vld [vmem:[#allocation5 + $0xa8] sm:$0xff]
        %v387 = vld [vmem:[#allocation5 + $0xb0] sm:$0xff]
        %v388 = vld [vmem:[#allocation5 + $0xb8] sm:$0xff]
        %v389 = vld [vmem:[#allocation5 + $0xc0] sm:$0xff]
        %v390 = vld [vmem:[#allocation5 + $0xc8] sm:$0xff]
        %v391 = vld [vmem:[#allocation5 + $0xd0] sm:$0xff]
        %v392 = vld [vmem:[#allocation5 + $0xd8] sm:$0xff]
        %v393 = vld [vmem:[#allocation5 + $0xe0] sm:$0xff]
        %v394 = vld [vmem:[#allocation5 + $0xe8] sm:$0xff]
        %v395 = vld [vmem:[#allocation5 + $0xf0] sm:$0xff]
        %v396 = vld [vmem:[#allocation5 + $0xf8] sm:$0xff]
        %v397 = vld [vmem:[#allocation5 + $0x100] sm:$0xff]
        %v398 = vld [vmem:[#allocation5 + $0x108] sm:$0xff]
        %v399 = vld [vmem:[#allocation5 + $0x110] sm:$0xff]
        %v400 = vld [vmem:[#allocation5 + $0x118] sm:$0xff]
        %v401 = vld [vmem:[#allocation5 + $0x120] sm:$0xff]
        %v402 = vld [vmem:[#allocation5 + $0x128] sm:$0xff]
        %v403 = vld [vmem:[#allocation5 + $0x130] sm:$0xff]
        %v404 = vld [vmem:[#allocation5 + $0x138] sm:$0xff]
        %v405 = vld [vmem:[#allocation5 + $0x140] sm:$0xff]
        %v406 = vld [vmem:[#allocation5 + $0x148] sm:$0xff]
        %v407 = vld [vmem:[#allocation5 + $0x150] sm:$0xff]
        %v408 = vld [vmem:[#allocation5 + $0x158] sm:$0xff]
        %v409 = vld [vmem:[#allocation5 + $0x160] sm:$0xff]
        %v410 = vld [vmem:[#allocation5 + $0x168] sm:$0xff]
        %v411 = vld [vmem:[#allocation5 + $0x170] sm:$0xff]
        %v412 = vld [vmem:[#allocation5 + $0x178] sm:$0xff]
        %v413 = vld [vmem:[#allocation5 + $0x180] sm:$0xff]
        %v414 = vld [vmem:[#allocation5 + $0x188] sm:$0xff]
        %v415 = vld [vmem:[#allocation5 + $0x190] sm:$0xff]
        %v416 = vld [vmem:[#allocation5 + $0x198] sm:$0xff]
        %v417 = vld [vmem:[#allocation5 + $0x1a0] sm:$0xff]
        %v418 = vld [vmem:[#allocation5 + $0x1a8] sm:$0xff]
        %v419 = vld [vmem:[#allocation5 + $0x1b0] sm:$0xff]
        %v420 = vld [vmem:[#allocation5 + $0x1b8] sm:$0xff]
        %v421 = vld [vmem:[#allocation5 + $0x1c0] sm:$0xff]
        %v422 = vld [vmem:[#allocation5 + $0x1c8] sm:$0xff]
        %v423 = vld [vmem:[#allocation5 + $0x1d0] sm:$0xff]
        %v424 = vld [vmem:[#allocation5 + $0x1d8] sm:$0xff]
        %v425 = vld [vmem:[#allocation5 + $0x1e0] sm:$0xff]
        %v426 = vld [vmem:[#allocation5 + $0x1e8] sm:$0xff]
        %v427 = vld [vmem:[#allocation5 + $0x1f0] sm:$0xff]
        %v428 = vld [vmem:[#allocation5 + $0x1f8] sm:$0xff]
        %v429 = vld [vmem:[#allocation5 + $0x200] sm:$0xff]
        %v430 = vld [vmem:[#allocation5 + $0x208] sm:$0xff]
        %v431 = vld [vmem:[#allocation5 + $0x210] sm:$0xff]
        %v432 = vld [vmem:[#allocation5 + $0x218] sm:$0xff]
        %v433 = vld [vmem:[#allocation5 + $0x220] sm:$0xff]
        %v434 = vld [vmem:[#allocation5 + $0x228] sm:$0xff]
        %v435 = vld [vmem:[#allocation5 + $0x230] sm:$0xff]
        %v436 = vld [vmem:[#allocation5 + $0x238] sm:$0xff]
        %v437 = vld [vmem:[#allocation5 + $0x240] sm:$0xff]
        %v438 = vld [vmem:[#allocation5 + $0x248] sm:$0xff]
        %v439 = vld [vmem:[#allocation5 + $0x250] sm:$0xff]
        %v440 = vld [vmem:[#allocation5 + $0x258] sm:$0xff]
        %v441 = vld [vmem:[#allocation5 + $0x260] sm:$0xff]
        %v442 = vld [vmem:[#allocation5 + $0x268] sm:$0xff]
        %v443 = vld [vmem:[#allocation5 + $0x270] sm:$0xff]
        %v444 = vld [vmem:[#allocation5 + $0x278] sm:$0xff]
        %v445 = vld [vmem:[#allocation5 + $0x280] sm:$0xff]
        %v446 = vld [vmem:[#allocation5 + $0x288] sm:$0xff]
        %v447 = vld [vmem:[#allocation5 + $0x290] sm:$0xff]
        %v448 = vld [vmem:[#allocation5 + $0x298] sm:$0xff]
        %v449 = vld [vmem:[#allocation5 + $0x2a0] sm:$0xff]
        %v450 = vld [vmem:[#allocation5 + $0x2a8] sm:$0xff]
        %v451 = vld [vmem:[#allocation5 + $0x2b0] sm:$0xff]
        %v452 = vld [vmem:[#allocation5 + $0x2b8] sm:$0xff]
        %v453 = vld [vmem:[#allocation5 + $0x2c0] sm:$0xff]
        %v454 = vld [vmem:[#allocation5 + $0x2c8] sm:$0xff]
        %v455 = vld [vmem:[#allocation5 + $0x2d0] sm:$0xff]
        %v456 = vld [vmem:[#allocation5 + $0x2d8] sm:$0xff]
        %v457 = vld [vmem:[#allocation5 + $0x2e0] sm:$0xff]
        %v458 = vld [vmem:[#allocation5 + $0x2e8] sm:$0xff]
        %v459 = vld [vmem:[#allocation5 + $0x2f0] sm:$0xff]
        %v460 = vld [vmem:[#allocation5 + $0x2f8] sm:$0xff]
        %v461 = vld [vmem:[#allocation5 + $0x300] sm:$0xff]
        %v462 = vld [vmem:[#allocation5 + $0x308] sm:$0xff]
        %v463 = vld [vmem:[#allocation5 + $0x310] sm:$0xff]
        %v464 = vld [vmem:[#allocation5 + $0x318] sm:$0xff]
        %v465 = vld [vmem:[#allocation5 + $0x320] sm:$0xff]
        %v466 = vld [vmem:[#allocation5 + $0x328] sm:$0xff]
        %v467 = vld [vmem:[#allocation5 + $0x330] sm:$0xff]
        %v468 = vld [vmem:[#allocation5 + $0x338] sm:$0xff]
        %v469 = vld [vmem:[#allocation5 + $0x340] sm:$0xff]
        %v470 = vld [vmem:[#allocation5 + $0x348] sm:$0xff]
        %v471 = vld [vmem:[#allocation5 + $0x350] sm:$0xff]
        %v472 = vld [vmem:[#allocation5 + $0x358] sm:$0xff]
        %v473 = vld [vmem:[#allocation5 + $0x360] sm:$0xff]
        %v474 = vld [vmem:[#allocation5 + $0x368] sm:$0xff]
        %v475 = vld [vmem:[#allocation5 + $0x370] sm:$0xff]
        %v476 = vld [vmem:[#allocation5 + $0x378] sm:$0xff]
        %v477 = vld [vmem:[#allocation5 + $0x380] sm:$0xff]
        %v478 = vld [vmem:[#allocation5 + $0x388] sm:$0xff]
        %v479 = vld [vmem:[#allocation5 + $0x390] sm:$0xff]
        %v480 = vld [vmem:[#allocation5 + $0x398] sm:$0xff]
        %v481 = vld [vmem:[#allocation5 + $0x3a0] sm:$0xff]
        %v482 = vld [vmem:[#allocation5 + $0x3a8] sm:$0xff]
        %v483 = vld [vmem:[#allocation5 + $0x3b0] sm:$0xff]
        %v484 = vld [vmem:[#allocation5 + $0x3b8] sm:$0xff]
        %v485 = vld [vmem:[#allocation5 + $0x3c0] sm:$0xff]
        %v486 = vld [vmem:[#allocation5 + $0x3c8] sm:$0xff]
        %v487 = vld [vmem:[#allocation5 + $0x3d0] sm:$0xff]
        %v488 = vld [vmem:[#allocation5 + $0x3d8] sm:$0xff]
        %v489 = vld [vmem:[#allocation5 + $0x3e0] sm:$0xff]
        %v490 = vld [vmem:[#allocation5 + $0x3e8] sm:$0xff]
        %v491 = vld [vmem:[#allocation5 + $0x3f0] sm:$0xff]
        %v492 = vld [vmem:[#allocation5 + $0x3f8] sm:$0xff]
        %v493 = vld [vmem:[#allocation7] sm:$0x3]
        %v495 = vperm.slane %v493, 0
        %v496 = vperm.slane %v493, 1
        %v503 = vunpack.c.l.b16 %v361
        %v504 = vunpack.c.h.b16 %v361
        %v505 = vunpack.c.l.b16 %v362
        %v506 = vunpack.c.h.b16 %v362
        %v507 = vunpack.c.l.b16 %v363
        %v508 = vunpack.c.h.b16 %v363
        %v509 = vunpack.c.l.b16 %v364
        %v510 = vunpack.c.h.b16 %v364
        %v511 = vpack.c.b16 %v503, %v503
        %v512 = vpack.c.b16 %v504, %v504
        %v513 = vpack.c.b16 %v505, %v505
        %v514 = vpack.c.b16 %v506, %v506
        %v515 = vpack.c.b16 %v507, %v507
        %v516 = vpack.c.b16 %v508, %v508
        %v517 = vpack.c.b16 %v509, %v509
        %v518 = vpack.c.b16 %v510, %v510
        %v655 = vunpack.c.l.b16 %v365
        %v656 = vunpack.c.h.b16 %v365
        %v657 = vunpack.c.l.b16 %v366
        %v658 = vunpack.c.h.b16 %v366
        %v659 = vunpack.c.l.b16 %v367
        %v660 = vunpack.c.h.b16 %v367
        %v661 = vunpack.c.l.b16 %v368
        %v662 = vunpack.c.h.b16 %v368
        %v663 = vunpack.c.l.b16 %v369
        %v664 = vunpack.c.h.b16 %v369
        %v665 = vunpack.c.l.b16 %v370
        %v666 = vunpack.c.h.b16 %v370
        %v667 = vunpack.c.l.b16 %v371
        %v668 = vunpack.c.h.b16 %v371
        %v669 = vunpack.c.l.b16 %v372
        %v670 = vunpack.c.h.b16 %v372
        %v671 = vunpack.c.l.b16 %v373
        %v672 = vunpack.c.h.b16 %v373
        %v673 = vunpack.c.l.b16 %v374
        %v674 = vunpack.c.h.b16 %v374
        %v675 = vunpack.c.l.b16 %v375
        %v676 = vunpack.c.h.b16 %v375
        %v677 = vunpack.c.l.b16 %v376
        %v678 = vunpack.c.h.b16 %v376
        %v679 = vunpack.c.l.b16 %v377
        %v680 = vunpack.c.h.b16 %v377
        %v681 = vunpack.c.l.b16 %v378
        %v682 = vunpack.c.h.b16 %v378
        %v683 = vunpack.c.l.b16 %v379
        %v684 = vunpack.c.h.b16 %v379
        %v685 = vunpack.c.l.b16 %v380
        %v686 = vunpack.c.h.b16 %v380
        %v687 = vunpack.c.l.b16 %v381
        %v688 = vunpack.c.h.b16 %v381
        %v689 = vunpack.c.l.b16 %v382
        %v690 = vunpack.c.h.b16 %v382
        %v691 = vunpack.c.l.b16 %v383
        %v692 = vunpack.c.h.b16 %v383
        %v693 = vunpack.c.l.b16 %v384
        %v694 = vunpack.c.h.b16 %v384
        %v695 = vunpack.c.l.b16 %v385
        %v696 = vunpack.c.h.b16 %v385
        %v697 = vunpack.c.l.b16 %v386
        %v698 = vunpack.c.h.b16 %v386
        %v699 = vunpack.c.l.b16 %v387
        %v700 = vunpack.c.h.b16 %v387
        %v701 = vunpack.c.l.b16 %v388
        %v702 = vunpack.c.h.b16 %v388
        %v703 = vunpack.c.l.b16 %v389
        %v704 = vunpack.c.h.b16 %v389
        %v705 = vunpack.c.l.b16 %v390
        %v706 = vunpack.c.h.b16 %v390
        %v707 = vunpack.c.l.b16 %v391
        %v708 = vunpack.c.h.b16 %v391
        %v709 = vunpack.c.l.b16 %v392
        %v710 = vunpack.c.h.b16 %v392
        %v711 = vunpack.c.l.b16 %v393
        %v712 = vunpack.c.h.b16 %v393
        %v713 = vunpack.c.l.b16 %v394
        %v714 = vunpack.c.h.b16 %v394
        %v715 = vunpack.c.l.b16 %v395
        %v716 = vunpack.c.h.b16 %v395
        %v717 = vunpack.c.l.b16 %v396
        %v718 = vunpack.c.h.b16 %v396
        %v719 = vunpack.c.l.b16 %v397
        %v720 = vunpack.c.h.b16 %v397
        %v721 = vunpack.c.l.b16 %v398
        %v722 = vunpack.c.h.b16 %v398
        %v723 = vunpack.c.l.b16 %v399
        %v724 = vunpack.c.h.b16 %v399
        %v725 = vunpack.c.l.b16 %v400
        %v726 = vunpack.c.h.b16 %v400
        %v727 = vunpack.c.l.b16 %v401
        %v728 = vunpack.c.h.b16 %v401
        %v729 = vunpack.c.l.b16 %v402
        %v730 = vunpack.c.h.b16 %v402
        %v731 = vunpack.c.l.b16 %v403
        %v732 = vunpack.c.h.b16 %v403
        %v733 = vunpack.c.l.b16 %v404
        %v734 = vunpack.c.h.b16 %v404
        %v735 = vunpack.c.l.b16 %v405
        %v736 = vunpack.c.h.b16 %v405
        %v737 = vunpack.c.l.b16 %v406
        %v738 = vunpack.c.h.b16 %v406
        %v739 = vunpack.c.l.b16 %v407
        %v740 = vunpack.c.h.b16 %v407
        %v741 = vunpack.c.l.b16 %v408
        %v742 = vunpack.c.h.b16 %v408
        %v743 = vunpack.c.l.b16 %v409
        %v744 = vunpack.c.h.b16 %v409
        %v745 = vunpack.c.l.b16 %v410
        %v746 = vunpack.c.h.b16 %v410
        %v747 = vunpack.c.l.b16 %v411
        %v748 = vunpack.c.h.b16 %v411
        %v749 = vunpack.c.l.b16 %v412
        %v750 = vunpack.c.h.b16 %v412
        %v751 = vunpack.c.l.b16 %v413
        %v752 = vunpack.c.h.b16 %v413
        %v753 = vunpack.c.l.b16 %v414
        %v754 = vunpack.c.h.b16 %v414
        %v755 = vunpack.c.l.b16 %v415
        %v756 = vunpack.c.h.b16 %v415
        %v757 = vunpack.c.l.b16 %v416
        %v758 = vunpack.c.h.b16 %v416
        %v759 = vunpack.c.l.b16 %v417
        %v760 = vunpack.c.h.b16 %v417
        %v761 = vunpack.c.l.b16 %v418
        %v762 = vunpack.c.h.b16 %v418
        %v763 = vunpack.c.l.b16 %v419
        %v764 = vunpack.c.h.b16 %v419
        %v765 = vunpack.c.l.b16 %v420
        %v766 = vunpack.c.h.b16 %v420
        %v767 = vunpack.c.l.b16 %v421
        %v768 = vunpack.c.h.b16 %v421
        %v769 = vunpack.c.l.b16 %v422
        %v770 = vunpack.c.h.b16 %v422
        %v771 = vunpack.c.l.b16 %v423
        %v772 = vunpack.c.h.b16 %v423
        %v773 = vunpack.c.l.b16 %v424
        %v774 = vunpack.c.h.b16 %v424
        %v775 = vunpack.c.l.b16 %v425
        %v776 = vunpack.c.h.b16 %v425
        %v777 = vunpack.c.l.b16 %v426
        %v778 = vunpack.c.h.b16 %v426
        %v779 = vunpack.c.l.b16 %v427
        %v780 = vunpack.c.h.b16 %v427
        %v781 = vunpack.c.l.b16 %v428
        %v782 = vunpack.c.h.b16 %v428
        %v783 = vunpack.c.l.b16 %v429
        %v784 = vunpack.c.h.b16 %v429
        %v785 = vunpack.c.l.b16 %v430
        %v786 = vunpack.c.h.b16 %v430
        %v787 = vunpack.c.l.b16 %v431
        %v788 = vunpack.c.h.b16 %v431
        %v789 = vunpack.c.l.b16 %v432
        %v790 = vunpack.c.h.b16 %v432
        %v791 = vunpack.c.l.b16 %v433
        %v792 = vunpack.c.h.b16 %v433
        %v793 = vunpack.c.l.b16 %v434
        %v794 = vunpack.c.h.b16 %v434
        %v795 = vunpack.c.l.b16 %v435
        %v796 = vunpack.c.h.b16 %v435
        %v797 = vunpack.c.l.b16 %v436
        %v798 = vunpack.c.h.b16 %v436
        %v799 = vunpack.c.l.b16 %v437
        %v800 = vunpack.c.h.b16 %v437
        %v801 = vunpack.c.l.b16 %v438
        %v802 = vunpack.c.h.b16 %v438
        %v803 = vunpack.c.l.b16 %v439
        %v804 = vunpack.c.h.b16 %v439
        %v805 = vunpack.c.l.b16 %v440
        %v806 = vunpack.c.h.b16 %v440
        %v807 = vunpack.c.l.b16 %v441
        %v808 = vunpack.c.h.b16 %v441
        %v809 = vunpack.c.l.b16 %v442
        %v810 = vunpack.c.h.b16 %v442
        %v811 = vunpack.c.l.b16 %v443
        %v812 = vunpack.c.h.b16 %v443
        %v813 = vunpack.c.l.b16 %v444
        %v814 = vunpack.c.h.b16 %v444
        %v815 = vunpack.c.l.b16 %v445
        %v816 = vunpack.c.h.b16 %v445
        %v817 = vunpack.c.l.b16 %v446
        %v818 = vunpack.c.h.b16 %v446
        %v819 = vunpack.c.l.b16 %v447
        %v820 = vunpack.c.h.b16 %v447
        %v821 = vunpack.c.l.b16 %v448
        %v822 = vunpack.c.h.b16 %v448
        %v823 = vunpack.c.l.b16 %v449
        %v824 = vunpack.c.h.b16 %v449
        %v825 = vunpack.c.l.b16 %v450
        %v826 = vunpack.c.h.b16 %v450
        %v827 = vunpack.c.l.b16 %v451
        %v828 = vunpack.c.h.b16 %v451
        %v829 = vunpack.c.l.b16 %v452
        %v830 = vunpack.c.h.b16 %v452
        %v831 = vunpack.c.l.b16 %v453
        %v832 = vunpack.c.h.b16 %v453
        %v833 = vunpack.c.l.b16 %v454
        %v834 = vunpack.c.h.b16 %v454
        %v835 = vunpack.c.l.b16 %v455
        %v836 = vunpack.c.h.b16 %v455
        %v837 = vunpack.c.l.b16 %v456
        %v838 = vunpack.c.h.b16 %v456
        %v839 = vunpack.c.l.b16 %v457
        %v840 = vunpack.c.h.b16 %v457
        %v841 = vunpack.c.l.b16 %v458
        %v842 = vunpack.c.h.b16 %v458
        %v843 = vunpack.c.l.b16 %v459
        %v844 = vunpack.c.h.b16 %v459
        %v845 = vunpack.c.l.b16 %v460
        %v846 = vunpack.c.h.b16 %v460
        %v847 = vunpack.c.l.b16 %v461
        %v848 = vunpack.c.h.b16 %v461
        %v849 = vunpack.c.l.b16 %v462
        %v850 = vunpack.c.h.b16 %v462
        %v851 = vunpack.c.l.b16 %v463
        %v852 = vunpack.c.h.b16 %v463
        %v853 = vunpack.c.l.b16 %v464
        %v854 = vunpack.c.h.b16 %v464
        %v855 = vunpack.c.l.b16 %v465
        %v856 = vunpack.c.h.b16 %v465
        %v857 = vunpack.c.l.b16 %v466
        %v858 = vunpack.c.h.b16 %v466
        %v859 = vunpack.c.l.b16 %v467
        %v860 = vunpack.c.h.b16 %v467
        %v861 = vunpack.c.l.b16 %v468
        %v862 = vunpack.c.h.b16 %v468
        %v863 = vunpack.c.l.b16 %v469
        %v864 = vunpack.c.h.b16 %v469
        %v865 = vunpack.c.l.b16 %v470
        %v866 = vunpack.c.h.b16 %v470
        %v867 = vunpack.c.l.b16 %v471
        %v868 = vunpack.c.h.b16 %v471
        %v869 = vunpack.c.l.b16 %v472
        %v870 = vunpack.c.h.b16 %v472
        %v871 = vunpack.c.l.b16 %v473
        %v872 = vunpack.c.h.b16 %v473
        %v873 = vunpack.c.l.b16 %v474
        %v874 = vunpack.c.h.b16 %v474
        %v875 = vunpack.c.l.b16 %v475
        %v876 = vunpack.c.h.b16 %v475
        %v877 = vunpack.c.l.b16 %v476
        %v878 = vunpack.c.h.b16 %v476
        %v879 = vunpack.c.l.b16 %v477
        %v880 = vunpack.c.h.b16 %v477
        %v881 = vunpack.c.l.b16 %v478
        %v882 = vunpack.c.h.b16 %v478
        %v883 = vunpack.c.l.b16 %v479
        %v884 = vunpack.c.h.b16 %v479
        %v885 = vunpack.c.l.b16 %v480
        %v886 = vunpack.c.h.b16 %v480
        %v887 = vunpack.c.l.b16 %v481
        %v888 = vunpack.c.h.b16 %v481
        %v889 = vunpack.c.l.b16 %v482
        %v890 = vunpack.c.h.b16 %v482
        %v891 = vunpack.c.l.b16 %v483
        %v892 = vunpack.c.h.b16 %v483
        %v893 = vunpack.c.l.b16 %v484
        %v894 = vunpack.c.h.b16 %v484
        %v895 = vunpack.c.l.b16 %v485
        %v896 = vunpack.c.h.b16 %v485
        %v897 = vunpack.c.l.b16 %v486
        %v898 = vunpack.c.h.b16 %v486
        %v899 = vunpack.c.l.b16 %v487
        %v900 = vunpack.c.h.b16 %v487
        %v901 = vunpack.c.l.b16 %v488
        %v902 = vunpack.c.h.b16 %v488
        %v903 = vunpack.c.l.b16 %v489
        %v904 = vunpack.c.h.b16 %v489
        %v905 = vunpack.c.l.b16 %v490
        %v906 = vunpack.c.h.b16 %v490
        %v907 = vunpack.c.l.b16 %v491
        %v908 = vunpack.c.h.b16 %v491
        %v909 = vunpack.c.l.b16 %v492
        %v910 = vunpack.c.h.b16 %v492
        %v911 = vpack.c.b16 %v657, %v655
        %v912 = vpack.c.b16 %v658, %v656
        %v913 = vpack.c.b16 %v661, %v659
        %v914 = vpack.c.b16 %v662, %v660
        %v915 = vpack.c.b16 %v665, %v663
        %v916 = vpack.c.b16 %v666, %v664
        %v917 = vpack.c.b16 %v669, %v667
        %v918 = vpack.c.b16 %v670, %v668
        %v919 = vpack.c.b16 %v673, %v671
        %v920 = vpack.c.b16 %v674, %v672
        %v921 = vpack.c.b16 %v677, %v675
        %v922 = vpack.c.b16 %v678, %v676
        %v923 = vpack.c.b16 %v681, %v679
        %v924 = vpack.c.b16 %v682, %v680
        %v925 = vpack.c.b16 %v685, %v683
        %v926 = vpack.c.b16 %v686, %v684
        %v927 = vpack.c.b16 %v689, %v687
        %v928 = vpack.c.b16 %v690, %v688
        %v929 = vpack.c.b16 %v693, %v691
        %v930 = vpack.c.b16 %v694, %v692
        %v931 = vpack.c.b16 %v697, %v695
        %v932 = vpack.c.b16 %v698, %v696
        %v933 = vpack.c.b16 %v701, %v699
        %v934 = vpack.c.b16 %v702, %v700
        %v935 = vpack.c.b16 %v705, %v703
        %v936 = vpack.c.b16 %v706, %v704
        %v937 = vpack.c.b16 %v709, %v707
        %v938 = vpack.c.b16 %v710, %v708
        %v939 = vpack.c.b16 %v713, %v711
        %v940 = vpack.c.b16 %v714, %v712
        %v941 = vpack.c.b16 %v717, %v715
        %v942 = vpack.c.b16 %v718, %v716
        %v943 = vpack.c.b16 %v721, %v719
        %v944 = vpack.c.b16 %v722, %v720
        %v945 = vpack.c.b16 %v725, %v723
        %v946 = vpack.c.b16 %v726, %v724
        %v947 = vpack.c.b16 %v729, %v727
        %v948 = vpack.c.b16 %v730, %v728
        %v949 = vpack.c.b16 %v733, %v731
        %v950 = vpack.c.b16 %v734, %v732
        %v951 = vpack.c.b16 %v737, %v735
        %v952 = vpack.c.b16 %v738, %v736
        %v953 = vpack.c.b16 %v741, %v739
        %v954 = vpack.c.b16 %v742, %v740
        %v955 = vpack.c.b16 %v745, %v743
        %v956 = vpack.c.b16 %v746, %v744
        %v957 = vpack.c.b16 %v749, %v747
        %v958 = vpack.c.b16 %v750, %v748
        %v959 = vpack.c.b16 %v753, %v751
        %v960 = vpack.c.b16 %v754, %v752
        %v961 = vpack.c.b16 %v757, %v755
        %v962 = vpack.c.b16 %v758, %v756
        %v963 = vpack.c.b16 %v761, %v759
        %v964 = vpack.c.b16 %v762, %v760
        %v965 = vpack.c.b16 %v765, %v763
        %v966 = vpack.c.b16 %v766, %v764
        %v967 = vpack.c.b16 %v769, %v767
        %v968 = vpack.c.b16 %v770, %v768
        %v969 = vpack.c.b16 %v773, %v771
        %v970 = vpack.c.b16 %v774, %v772
        %v971 = vpack.c.b16 %v777, %v775
        %v972 = vpack.c.b16 %v778, %v776
        %v973 = vpack.c.b16 %v781, %v779
        %v974 = vpack.c.b16 %v782, %v780
        %v975 = vpack.c.b16 %v785, %v783
        %v976 = vpack.c.b16 %v786, %v784
        %v977 = vpack.c.b16 %v789, %v787
        %v978 = vpack.c.b16 %v790, %v788
        %v979 = vpack.c.b16 %v793, %v791
        %v980 = vpack.c.b16 %v794, %v792
        %v981 = vpack.c.b16 %v797, %v795
        %v982 = vpack.c.b16 %v798, %v796
        %v983 = vpack.c.b16 %v801, %v799
        %v984 = vpack.c.b16 %v802, %v800
        %v985 = vpack.c.b16 %v805, %v803
        %v986 = vpack.c.b16 %v806, %v804
        %v987 = vpack.c.b16 %v809, %v807
        %v988 = vpack.c.b16 %v810, %v808
        %v989 = vpack.c.b16 %v813, %v811
        %v990 = vpack.c.b16 %v814, %v812
        %v991 = vpack.c.b16 %v817, %v815
        %v992 = vpack.c.b16 %v818, %v816
        %v993 = vpack.c.b16 %v821, %v819
        %v994 = vpack.c.b16 %v822, %v820
        %v995 = vpack.c.b16 %v825, %v823
        %v996 = vpack.c.b16 %v826, %v824
        %v997 = vpack.c.b16 %v829, %v827
        %v998 = vpack.c.b16 %v830, %v828
        %v999 = vpack.c.b16 %v833, %v831
        %v1000 = vpack.c.b16 %v834, %v832
        %v1001 = vpack.c.b16 %v837, %v835
        %v1002 = vpack.c.b16 %v838, %v836
        %v1003 = vpack.c.b16 %v841, %v839
        %v1004 = vpack.c.b16 %v842, %v840
        %v1005 = vpack.c.b16 %v845, %v843
        %v1006 = vpack.c.b16 %v846, %v844
        %v1007 = vpack.c.b16 %v849, %v847
        %v1008 = vpack.c.b16 %v850, %v848
        %v1009 = vpack.c.b16 %v853, %v851
        %v1010 = vpack.c.b16 %v854, %v852
        %v1011 = vpack.c.b16 %v857, %v855
        %v1012 = vpack.c.b16 %v858, %v856
        %v1013 = vpack.c.b16 %v861, %v859
        %v1014 = vpack.c.b16 %v862, %v860
        %v1015 = vpack.c.b16 %v865, %v863
        %v1016 = vpack.c.b16 %v866, %v864
        %v1017 = vpack.c.b16 %v869, %v867
        %v1018 = vpack.c.b16 %v870, %v868
        %v1019 = vpack.c.b16 %v873, %v871
        %v1020 = vpack.c.b16 %v874, %v872
        %v1021 = vpack.c.b16 %v877, %v875
        %v1022 = vpack.c.b16 %v878, %v876
        %v1023 = vpack.c.b16 %v881, %v879
        %v1024 = vpack.c.b16 %v882, %v880
        %v1025 = vpack.c.b16 %v885, %v883
        %v1026 = vpack.c.b16 %v886, %v884
        %v1027 = vpack.c.b16 %v889, %v887
        %v1028 = vpack.c.b16 %v890, %v888
        %v1029 = vpack.c.b16 %v893, %v891
        %v1030 = vpack.c.b16 %v894, %v892
        %v1031 = vpack.c.b16 %v897, %v895
        %v1032 = vpack.c.b16 %v898, %v896
        %v1033 = vpack.c.b16 %v901, %v899
        %v1034 = vpack.c.b16 %v902, %v900
        %v1035 = vpack.c.b16 %v905, %v903
        %v1036 = vpack.c.b16 %v906, %v904
        %v1037 = vpack.c.b16 %v909, %v907
        %v1038 = vpack.c.b16 %v910, %v908
        %1167 = vmatpush.bf16.msra.mxu0 %v925
        %1168 = vmatpush.bf16.msra.mxu0 %v923
        %1169 = vmatpush.bf16.msra.mxu0 %v921
        %1170 = vmatpush.bf16.msra.mxu0 %v919
        %1171 = vmatpush.bf16.msra.mxu0 %v917
        %1172 = vmatpush.bf16.msra.mxu0 %v915
        %1173 = vmatpush.bf16.msra.mxu0 %v913
        %1174 = vmatpush.bf16.msra.mxu0 %v911
        %1175 = vmatmul.bf16.gmra.mxu0 %v511
        %v1176 = vpop.f32.mrf.mxu0
        %v1177 = vadd.f32 %v495, %v1176
        %v1178 = vpop.f32.mrf.mxu0
        %1179 = vdwg.mxu0
        %1180 = vmatpush.bf16.msra.mxu0 %v941
        %1181 = vmatpush.bf16.msra.mxu0 %v939
        %1182 = vmatpush.bf16.msra.mxu0 %v937
        %1183 = vmatpush.bf16.msra.mxu0 %v935
        %1184 = vmatpush.bf16.msra.mxu0 %v933
        %1185 = vmatpush.bf16.msra.mxu0 %v931
        %1186 = vmatpush.bf16.msra.mxu0 %v929
        %1187 = vmatpush.bf16.msra.mxu0 %v927
        %1188 = vmatmul.bf16.gmra.mxu0 %v512
        %v1189 = vpop.f32.mrf.mxu0
        %v1190 = vadd.f32 %v1177, %v1189
        %v1191 = vpop.f32.mrf.mxu0
        %1192 = vdwg.mxu0
        %1193 = vmatpush.bf16.msra.mxu0 %v957
        %1194 = vmatpush.bf16.msra.mxu0 %v955
        %1195 = vmatpush.bf16.msra.mxu0 %v953
        %1196 = vmatpush.bf16.msra.mxu0 %v951
        %1197 = vmatpush.bf16.msra.mxu0 %v949
        %1198 = vmatpush.bf16.msra.mxu0 %v947
        %1199 = vmatpush.bf16.msra.mxu0 %v945
        %1200 = vmatpush.bf16.msra.mxu0 %v943
        %1201 = vmatmul.bf16.gmra.mxu0 %v513
        %v1202 = vpop.f32.mrf.mxu0
        %v1203 = vadd.f32 %v1190, %v1202
        %v1204 = vpop.f32.mrf.mxu0
        %1205 = vdwg.mxu0
        %1206 = vmatpush.bf16.msra.mxu0 %v973
        %1207 = vmatpush.bf16.msra.mxu0 %v971
        %1208 = vmatpush.bf16.msra.mxu0 %v969
        %1209 = vmatpush.bf16.msra.mxu0 %v967
        %1210 = vmatpush.bf16.msra.mxu0 %v965
        %1211 = vmatpush.bf16.msra.mxu0 %v963
        %1212 = vmatpush.bf16.msra.mxu0 %v961
        %1213 = vmatpush.bf16.msra.mxu0 %v959
        %1214 = vmatmul.bf16.gmra.mxu0 %v514
        %v1215 = vpop.f32.mrf.mxu0
        %v1216 = vadd.f32 %v1203, %v1215
        %v1217 = vpop.f32.mrf.mxu0
        %1218 = vdwg.mxu0
        %1219 = vmatpush.bf16.msra.mxu0 %v989
        %1220 = vmatpush.bf16.msra.mxu0 %v987
        %1221 = vmatpush.bf16.msra.mxu0 %v985
        %1222 = vmatpush.bf16.msra.mxu0 %v983
        %1223 = vmatpush.bf16.msra.mxu0 %v981
        %1224 = vmatpush.bf16.msra.mxu0 %v979
        %1225 = vmatpush.bf16.msra.mxu0 %v977
        %1226 = vmatpush.bf16.msra.mxu0 %v975
        %1227 = vmatmul.bf16.gmra.mxu0 %v515
        %v1228 = vpop.f32.mrf.mxu0
        %v1229 = vadd.f32 %v1216, %v1228
        %v1230 = vpop.f32.mrf.mxu0
        %1231 = vdwg.mxu0
        %1232 = vmatpush.bf16.msra.mxu0 %v1005
        %1233 = vmatpush.bf16.msra.mxu0 %v1003
        %1234 = vmatpush.bf16.msra.mxu0 %v1001
        %1235 = vmatpush.bf16.msra.mxu0 %v999
        %1236 = vmatpush.bf16.msra.mxu0 %v997
        %1237 = vmatpush.bf16.msra.mxu0 %v995
        %1238 = vmatpush.bf16.msra.mxu0 %v993
        %1239 = vmatpush.bf16.msra.mxu0 %v991
        %1240 = vmatmul.bf16.gmra.mxu0 %v516
        %v1241 = vpop.f32.mrf.mxu0
        %v1242 = vadd.f32 %v1229, %v1241
        %v1243 = vpop.f32.mrf.mxu0
        %1244 = vdwg.mxu0
        %1245 = vmatpush.bf16.msra.mxu0 %v1021
        %1246 = vmatpush.bf16.msra.mxu0 %v1019
        %1247 = vmatpush.bf16.msra.mxu0 %v1017
        %1248 = vmatpush.bf16.msra.mxu0 %v1015
        %1249 = vmatpush.bf16.msra.mxu0 %v1013
        %1250 = vmatpush.bf16.msra.mxu0 %v1011
        %1251 = vmatpush.bf16.msra.mxu0 %v1009
        %1252 = vmatpush.bf16.msra.mxu0 %v1007
        %1253 = vmatmul.bf16.gmra.mxu0 %v517
        %v1254 = vpop.f32.mrf.mxu0
        %v1255 = vadd.f32 %v1242, %v1254
        %v1256 = vpop.f32.mrf.mxu0
        %1257 = vdwg.mxu0
        %1258 = vmatpush.bf16.msra.mxu0 %v1037
        %1259 = vmatpush.bf16.msra.mxu0 %v1035
        %1260 = vmatpush.bf16.msra.mxu0 %v1033
        %1261 = vmatpush.bf16.msra.mxu0 %v1031
        %1262 = vmatpush.bf16.msra.mxu0 %v1029
        %1263 = vmatpush.bf16.msra.mxu0 %v1027
        %1264 = vmatpush.bf16.msra.mxu0 %v1025
        %1265 = vmatpush.bf16.msra.mxu0 %v1023
        %1266 = vmatmul.bf16.gmra.mxu0 %v518
        %v1267 = vpop.f32.mrf.mxu0
        %v1268 = vadd.f32 %v1255, %v1267
        %v1269 = vpop.f32.mrf.mxu0
        %1270 = vdwg.mxu0
        %1271 = vmatpush.bf16.msra.mxu0 %v926
        %1272 = vmatpush.bf16.msra.mxu0 %v924
        %1273 = vmatpush.bf16.msra.mxu0 %v922
        %1274 = vmatpush.bf16.msra.mxu0 %v920
        %1275 = vmatpush.bf16.msra.mxu0 %v918
        %1276 = vmatpush.bf16.msra.mxu0 %v916
        %1277 = vmatpush.bf16.msra.mxu0 %v914
        %1278 = vmatpush.bf16.msra.mxu0 %v912
        %1279 = vmatmul.bf16.gmra.mxu0 %v511
        %v1280 = vpop.f32.mrf.mxu0
        %v1281 = vadd.f32 %v496, %v1280
        %v1282 = vpop.f32.mrf.mxu0
        %1283 = vdwg.mxu0
        %1284 = vmatpush.bf16.msra.mxu0 %v942
        %1285 = vmatpush.bf16.msra.mxu0 %v940
        %1286 = vmatpush.bf16.msra.mxu0 %v938
        %1287 = vmatpush.bf16.msra.mxu0 %v936
        %1288 = vmatpush.bf16.msra.mxu0 %v934
        %1289 = vmatpush.bf16.msra.mxu0 %v932
        %1290 = vmatpush.bf16.msra.mxu0 %v930
        %1291 = vmatpush.bf16.msra.mxu0 %v928
        %1292 = vmatmul.bf16.gmra.mxu0 %v512
        %v1293 = vpop.f32.mrf.mxu0
        %v1294 = vadd.f32 %v1281, %v1293
        %v1295 = vpop.f32.mrf.mxu0
        %1296 = vdwg.mxu0
        %1297 = vmatpush.bf16.msra.mxu0 %v958
        %1298 = vmatpush.bf16.msra.mxu0 %v956
        %1299 = vmatpush.bf16.msra.mxu0 %v954
        %1300 = vmatpush.bf16.msra.mxu0 %v952
        %1301 = vmatpush.bf16.msra.mxu0 %v950
        %1302 = vmatpush.bf16.msra.mxu0 %v948
        %1303 = vmatpush.bf16.msra.mxu0 %v946
        %1304 = vmatpush.bf16.msra.mxu0 %v944
        %1305 = vmatmul.bf16.gmra.mxu0 %v513
        %v1306 = vpop.f32.mrf.mxu0
        %v1307 = vadd.f32 %v1294, %v1306
        %v1308 = vpop.f32.mrf.mxu0
        %1309 = vdwg.mxu0
        %1310 = vmatpush.bf16.msra.mxu0 %v974
        %1311 = vmatpush.bf16.msra.mxu0 %v972
        %1312 = vmatpush.bf16.msra.mxu0 %v970
        %1313 = vmatpush.bf16.msra.mxu0 %v968
        %1314 = vmatpush.bf16.msra.mxu0 %v966
        %1315 = vmatpush.bf16.msra.mxu0 %v964
        %1316 = vmatpush.bf16.msra.mxu0 %v962
        %1317 = vmatpush.bf16.msra.mxu0 %v960
        %1318 = vmatmul.bf16.gmra.mxu0 %v514
        %v1319 = vpop.f32.mrf.mxu0
        %v1320 = vadd.f32 %v1307, %v1319
        %v1321 = vpop.f32.mrf.mxu0
        %1322 = vdwg.mxu0
        %1323 = vmatpush.bf16.msra.mxu0 %v990
        %1324 = vmatpush.bf16.msra.mxu0 %v988
        %1325 = vmatpush.bf16.msra.mxu0 %v986
        %1326 = vmatpush.bf16.msra.mxu0 %v984
        %1327 = vmatpush.bf16.msra.mxu0 %v982
        %1328 = vmatpush.bf16.msra.mxu0 %v980
        %1329 = vmatpush.bf16.msra.mxu0 %v978
        %1330 = vmatpush.bf16.msra.mxu0 %v976
        %1331 = vmatmul.bf16.gmra.mxu0 %v515
        %v1332 = vpop.f32.mrf.mxu0
        %v1333 = vadd.f32 %v1320, %v1332
        %v1334 = vpop.f32.mrf.mxu0
        %1335 = vdwg.mxu0
        %1336 = vmatpush.bf16.msra.mxu0 %v1006
        %1337 = vmatpush.bf16.msra.mxu0 %v1004
        %1338 = vmatpush.bf16.msra.mxu0 %v1002
        %1339 = vmatpush.bf16.msra.mxu0 %v1000
        %1340 = vmatpush.bf16.msra.mxu0 %v998
        %1341 = vmatpush.bf16.msra.mxu0 %v996
        %1342 = vmatpush.bf16.msra.mxu0 %v994
        %1343 = vmatpush.bf16.msra.mxu0 %v992
        %1344 = vmatmul.bf16.gmra.mxu0 %v516
        %v1345 = vpop.f32.mrf.mxu0
        %v1346 = vadd.f32 %v1333, %v1345
        %v1347 = vpop.f32.mrf.mxu0
        %1348 = vdwg.mxu0
        %1349 = vmatpush.bf16.msra.mxu0 %v1022
        %1350 = vmatpush.bf16.msra.mxu0 %v1020
        %1351 = vmatpush.bf16.msra.mxu0 %v1018
        %1352 = vmatpush.bf16.msra.mxu0 %v1016
        %1353 = vmatpush.bf16.msra.mxu0 %v1014
        %1354 = vmatpush.bf16.msra.mxu0 %v1012
        %1355 = vmatpush.bf16.msra.mxu0 %v1010
        %1356 = vmatpush.bf16.msra.mxu0 %v1008
        %1357 = vmatmul.bf16.gmra.mxu0 %v517
        %v1358 = vpop.f32.mrf.mxu0
        %v1359 = vadd.f32 %v1346, %v1358
        %v1360 = vpop.f32.mrf.mxu0
        %1361 = vdwg.mxu0
        %1362 = vmatpush.bf16.msra.mxu0 %v1038
        %1363 = vmatpush.bf16.msra.mxu0 %v1036
        %1364 = vmatpush.bf16.msra.mxu0 %v1034
        %1365 = vmatpush.bf16.msra.mxu0 %v1032
        %1366 = vmatpush.bf16.msra.mxu0 %v1030
        %1367 = vmatpush.bf16.msra.mxu0 %v1028
        %1368 = vmatpush.bf16.msra.mxu0 %v1026
        %1369 = vmatpush.bf16.msra.mxu0 %v1024
        %1370 = vmatmul.bf16.gmra.mxu0 %v518
        %v1371 = vpop.f32.mrf.mxu0
        %v1372 = vadd.f32 %v1359, %v1371
        %v1373 = vpop.f32.mrf.mxu0
        %1374 = vdwg.mxu0
        %v1375 = vmax.f32 %v1268, 0.0
        %v1376 = vmax.f32 %v1372, 0.0
        %v1377 = vpack.c.bf16 %v1375, %v1375
        %v1378 = vpack.c.bf16 %v1376, %v1376
        %v1379 = vld [vmem:[#allocation8] sm:$0xf]
        %v1380 = vld [vmem:[#allocation8 + $0x4] sm:$0xf]
        %v1381 = vld [vmem:[#allocation8 + $0x8] sm:$0xf]
        %v1382 = vld [vmem:[#allocation8 + $0xc] sm:$0xf]
        %v1383 = vld [vmem:[#allocation8 + $0x10] sm:$0xf]
        %v1384 = vld [vmem:[#allocation8 + $0x14] sm:$0xf]
        %v1385 = vld [vmem:[#allocation8 + $0x18] sm:$0xf]
        %v1386 = vld [vmem:[#allocation8 + $0x1c] sm:$0xf]
        %v1387 = vld [vmem:[#allocation8 + $0x20] sm:$0xf]
        %v1388 = vld [vmem:[#allocation8 + $0x24] sm:$0xf]
        %v1389 = vld [vmem:[#allocation8 + $0x28] sm:$0xf]
        %v1390 = vld [vmem:[#allocation8 + $0x2c] sm:$0xf]
        %v1391 = vld [vmem:[#allocation8 + $0x30] sm:$0xf]
        %v1392 = vld [vmem:[#allocation8 + $0x34] sm:$0xf]
        %v1393 = vld [vmem:[#allocation8 + $0x38] sm:$0xf]
        %v1394 = vld [vmem:[#allocation8 + $0x3c] sm:$0xf]
        %v1395 = vld [vmem:[#allocation8 + $0x40] sm:$0xf]
        %v1396 = vld [vmem:[#allocation8 + $0x44] sm:$0xf]
        %v1397 = vld [vmem:[#allocation8 + $0x48] sm:$0xf]
        %v1398 = vld [vmem:[#allocation8 + $0x4c] sm:$0xf]
        %v1399 = vld [vmem:[#allocation8 + $0x50] sm:$0xf]
        %v1400 = vld [vmem:[#allocation8 + $0x54] sm:$0xf]
        %v1401 = vld [vmem:[#allocation8 + $0x58] sm:$0xf]
        %v1402 = vld [vmem:[#allocation8 + $0x5c] sm:$0xf]
        %v1403 = vld [vmem:[#allocation8 + $0x60] sm:$0xf]
        %v1404 = vld [vmem:[#allocation8 + $0x64] sm:$0xf]
        %v1405 = vld [vmem:[#allocation8 + $0x68] sm:$0xf]
        %v1406 = vld [vmem:[#allocation8 + $0x6c] sm:$0xf]
        %v1407 = vld [vmem:[#allocation8 + $0x70] sm:$0xf]
        %v1408 = vld [vmem:[#allocation8 + $0x74] sm:$0xf]
        %v1409 = vld [vmem:[#allocation8 + $0x78] sm:$0xf]
        %v1410 = vld [vmem:[#allocation8 + $0x7c] sm:$0xf]
        %v1411 = vld [vmem:[%s4] sm:$0x1]
        %v1413 = vperm.slane %v1411, 0
        %v1447 = vunpack.c.l.b16 %v1379
        %v1448 = vunpack.c.l.b16 %v1380
        %v1449 = vunpack.c.l.b16 %v1381
        %v1450 = vunpack.c.l.b16 %v1382
        %v1451 = vunpack.c.l.b16 %v1383
        %v1452 = vunpack.c.l.b16 %v1384
        %v1453 = vunpack.c.l.b16 %v1385
        %v1454 = vunpack.c.l.b16 %v1386
        %v1455 = vunpack.c.l.b16 %v1387
        %v1456 = vunpack.c.l.b16 %v1388
        %v1457 = vunpack.c.l.b16 %v1389
        %v1458 = vunpack.c.l.b16 %v1390
        %v1459 = vunpack.c.l.b16 %v1391
        %v1460 = vunpack.c.l.b16 %v1392
        %v1461 = vunpack.c.l.b16 %v1393
        %v1462 = vunpack.c.l.b16 %v1394
        %v1463 = vunpack.c.l.b16 %v1395
        %v1464 = vunpack.c.l.b16 %v1396
        %v1465 = vunpack.c.l.b16 %v1397
        %v1466 = vunpack.c.l.b16 %v1398
        %v1467 = vunpack.c.l.b16 %v1399
        %v1468 = vunpack.c.l.b16 %v1400
        %v1469 = vunpack.c.l.b16 %v1401
        %v1470 = vunpack.c.l.b16 %v1402
        %v1471 = vunpack.c.l.b16 %v1403
        %v1472 = vunpack.c.l.b16 %v1404
        %v1473 = vunpack.c.l.b16 %v1405
        %v1474 = vunpack.c.l.b16 %v1406
        %v1475 = vunpack.c.l.b16 %v1407
        %v1476 = vunpack.c.l.b16 %v1408
        %v1477 = vunpack.c.l.b16 %v1409
        %v1478 = vunpack.c.l.b16 %v1410
        %v1479 = vpack.c.b16 %v1448, %v1447
        %v1480 = vpack.c.b16 %v1450, %v1449
        %v1481 = vpack.c.b16 %v1452, %v1451
        %v1482 = vpack.c.b16 %v1454, %v1453
        %v1483 = vpack.c.b16 %v1456, %v1455
        %v1484 = vpack.c.b16 %v1458, %v1457
        %v1485 = vpack.c.b16 %v1460, %v1459
        %v1486 = vpack.c.b16 %v1462, %v1461
        %v1487 = vpack.c.b16 %v1464, %v1463
        %v1488 = vpack.c.b16 %v1466, %v1465
        %v1489 = vpack.c.b16 %v1468, %v1467
        %v1490 = vpack.c.b16 %v1470, %v1469
        %v1491 = vpack.c.b16 %v1472, %v1471
        %v1492 = vpack.c.b16 %v1474, %v1473
        %v1493 = vpack.c.b16 %v1476, %v1475
        %v1494 = vpack.c.b16 %v1478, %v1477
        %1511 = vmatpush.bf16.msra.mxu0 %v1486
        %1512 = vmatpush.bf16.msra.mxu0 %v1485
        %1513 = vmatpush.bf16.msra.mxu0 %v1484
        %1514 = vmatpush.bf16.msra.mxu0 %v1483
        %1515 = vmatpush.bf16.msra.mxu0 %v1482
        %1516 = vmatpush.bf16.msra.mxu0 %v1481
        %1517 = vmatpush.bf16.msra.mxu0 %v1480
        %1518 = vmatpush.bf16.msra.mxu0 %v1479
        %1519 = vmatmul.bf16.gmra.mxu0 %v1377
        %v1520 = vpop.f32.mrf.mxu0
        %v1521 = vadd.f32 %v1413, %v1520
        %v1522 = vpop.f32.mrf.mxu0
        %1523 = vdwg.mxu0
        %1524 = vmatpush.bf16.msra.mxu0 %v1494
        %1525 = vmatpush.bf16.msra.mxu0 %v1493
        %1526 = vmatpush.bf16.msra.mxu0 %v1492
        %1527 = vmatpush.bf16.msra.mxu0 %v1491
        %1528 = vmatpush.bf16.msra.mxu0 %v1490
        %1529 = vmatpush.bf16.msra.mxu0 %v1489
        %1530 = vmatpush.bf16.msra.mxu0 %v1488
        %1531 = vmatpush.bf16.msra.mxu0 %v1487
        %1532 = vmatmul.bf16.gmra.mxu0 %v1378
        %v1533 = vpop.f32.mrf.mxu0
        %v1534 = vadd.f32 %v1521, %v1533
        %v1535 = vpop.f32.mrf.mxu0
        %1536 = vdwg.mxu0
        %v1537 = vmax.f32 %v1534, 0.0
        %v1538 = vpack.c.bf16 %v1537, %v1537
        %v1539 = vld [vmem:[#allocation10] sm:$0xf]
        %v1540 = vld [vmem:[#allocation10 + $0x4] sm:$0xf]
        %v1541 = vld [vmem:[#allocation10 + $0x8] sm:$0xf]
        %v1542 = vld [vmem:[#allocation10 + $0xc] sm:$0xf]
        %v1543 = vld [vmem:[#allocation10 + $0x10] sm:$0xf]
        %v1544 = vld [vmem:[#allocation10 + $0x14] sm:$0xf]
        %v1545 = vld [vmem:[#allocation10 + $0x18] sm:$0xf]
        %v1546 = vld [vmem:[#allocation10 + $0x1c] sm:$0xf]
        %v1547 = vld [vmem:[#allocation10 + $0x20] sm:$0xf]
        %v1548 = vld [vmem:[#allocation10 + $0x24] sm:$0xf]
        %v1549 = vld [vmem:[#allocation10 + $0x28] sm:$0xf]
        %v1550 = vld [vmem:[#allocation10 + $0x2c] sm:$0xf]
        %v1551 = vld [vmem:[#allocation10 + $0x30] sm:$0xf]
        %v1552 = vld [vmem:[#allocation10 + $0x34] sm:$0xf]
        %v1553 = vld [vmem:[#allocation10 + $0x38] sm:$0xf]
        %v1554 = vld [vmem:[#allocation10 + $0x3c] sm:$0xf]
        %v1555 = vld [vmem:[%s6] sm:$0x1]
        %v1557 = vperm.slane %v1555, 0
        %v1575 = vunpack.c.l.b16 %v1539
        %v1576 = vunpack.c.l.b16 %v1540
        %v1577 = vunpack.c.l.b16 %v1541
        %v1578 = vunpack.c.l.b16 %v1542
        %v1579 = vunpack.c.l.b16 %v1543
        %v1580 = vunpack.c.l.b16 %v1544
        %v1581 = vunpack.c.l.b16 %v1545
        %v1582 = vunpack.c.l.b16 %v1546
        %v1583 = vunpack.c.l.b16 %v1547
        %v1584 = vunpack.c.l.b16 %v1548
        %v1585 = vunpack.c.l.b16 %v1549
        %v1586 = vunpack.c.l.b16 %v1550
        %v1587 = vunpack.c.l.b16 %v1551
        %v1588 = vunpack.c.l.b16 %v1552
        %v1589 = vunpack.c.l.b16 %v1553
        %v1590 = vunpack.c.l.b16 %v1554
        %v1591 = vpack.c.b16 %v1576, %v1575
        %v1592 = vpack.c.b16 %v1578, %v1577
        %v1593 = vpack.c.b16 %v1580, %v1579
        %v1594 = vpack.c.b16 %v1582, %v1581
        %v1595 = vpack.c.b16 %v1584, %v1583
        %v1596 = vpack.c.b16 %v1586, %v1585
        %v1597 = vpack.c.b16 %v1588, %v1587
        %v1598 = vpack.c.b16 %v1590, %v1589
        %1607 = vmatpush.bf16.msra.mxu0 %v1598
        %1608 = vmatpush.bf16.msra.mxu0 %v1597
        %1609 = vmatpush.bf16.msra.mxu0 %v1596
        %1610 = vmatpush.bf16.msra.mxu0 %v1595
        %1611 = vmatpush.bf16.msra.mxu0 %v1594
        %1612 = vmatpush.bf16.msra.mxu0 %v1593
        %1613 = vmatpush.bf16.msra.mxu0 %v1592
        %1614 = vmatpush.bf16.msra.mxu0 %v1591
        %1615 = vmatmul.bf16.gmra.mxu0 %v1538
        %v1616 = vpop.f32.mrf.mxu0
        %v1617 = vadd.f32 %v1557, %v1616
        %v1618 = vpop.f32.mrf.mxu0
        %1619 = vdwg.mxu0
        %1620 = vmax.xlane.f32.xlu0 %v1617
        %v1621 = vpop.xlane.xlu0 %1620
        %v1622 = vsub.f32 %v1617, %v1621
        %v1623 = vmul.f32 %v1622, 1.442695
        %v1624 = vpow.pop %v1623
        %1625 = vadd.xlane.f32.xlu0 %v1624
        %v1626 = vpop.xlane.xlu0 %1625
        %v1627 = vrcp.pop %v1626
        %v1628 = vmul.f32 %v1626, %v1627
        %v1629 = vsub.f32 1.0, %v1628
        %v1630 = vmul.f32 %v1627, %v1629
        %v1631 = vadd.f32 %v1627, %v1630
        %vm1632 = vweird.f32 %v1626
        %vm1633 = vweird.f32 %v1627
        %vm1634 = vmor %vm1632, %vm1633
        %v1635 = vsel %vm1634, %v1627, %v1631
        %v1636 = vand.u32 2147483647, %v1626
        %vm1637 = vcmp.eq.f32.partialorder %v1636, 8.507059e+37
        %v1638 = vand.u32 %v1626, 2147483648
        %v1639 = vor.u32 1.1754944e-38, %v1638
        %v1640 = vsel %vm1637, %v1639, %v1635
        %v1641 = vmul.f32 %v1624, %v1640
        %1642 = vst [vmem:[%s360] sm:$0xff] %v1641
        %s1643 = sand.u32 %s186, 1
        %s1644 = scalar_lea.sflag [#allocation4], %s1643
        %s1645 = sand.u32 %s186, 1
        %s1646 = smul.addr %s1645, 8
        %s1647 = scalar_lea.vmem [#allocation11], %s1646
        // Predicated region
        $region69: #{tpu_custom_call.1} parent=47 // pred_check
          %p1648 = pneg %p196
        $region70: #{tpu_custom_call.1} parent=47 // pred_check_branch
          %1650 = sbr.rel (%p1648) target = $region72
        $region71: #{tpu_custom_call.1} parent=47 // pred_region
          %1652 = vsyncadd %s1644, 0
          %s1653 = smul.addr %s26, 8
          %s1654 = scalar_lea.hbm %s7, %s1653
          %s1656 = sshll.u32 %s1647, 4
          %s1657 = int_to_ptr.vmem [resolvable:$true] %s1656
          %s1658 = sshll.u32 %s1654, 4
          %s1659 = int_to_ptr.hbm [resolvable:$true] %s1658
          %1661 = dma.vmem_to_hbm [thread:$0]  %s1657, 128, %s1659, %s1644
        $region72: #{tpu_custom_call.1} parent=47 // pred_fallthru
          _
      $region48: #{tpu_custom_call.1} parent=5 // pred_fallthru
        _
      %p1662 = scmp.le.s32.totalorder 2, %s21
      // Predicated region
      $region73: #{tpu_custom_call.1} parent=5 // pred_check
        %p1663 = pneg %p1662
      $region74: #{tpu_custom_call.1} parent=5 // pred_check_branch
        %1665 = sbr.rel (%p1663) target = $region76
      $region75: #{tpu_custom_call.1} parent=5 // pred_region
        %s1666 = ssub.s32 %s21, 2
        // Predicated region
        $region77: #{tpu_custom_call.1} parent=75 // pred_check
          %p1667 = pneg %p202
        $region78: #{tpu_custom_call.1} parent=75 // pred_check_branch
          %1669 = sbr.rel (%p1667) target = $region80
        $region79: #{tpu_custom_call.1} parent=75 // pred_region
          %s1670 = sand.u32 %s187, 1
          %s1671 = scalar_lea.sflag [#allocation4], %s1670
          %s1672 = sand.u32 %s187, 1
          %s1673 = smul.addr %s1672, 8
          %s1674 = scalar_lea.vmem [#allocation11], %s1673
          %1676 = dma.done %s1671, 128
        $region80: #{tpu_custom_call.1} parent=75 // pred_fallthru
          _
      $region76: #{tpu_custom_call.1} parent=5 // pred_fallthru
        _
    $region6: #{tpu_custom_call.1} parent=1 // loop_footer
      %s25 = sadd.s32 1, %s21
    $region7: #{tpu_custom_call.1} parent=1 // loop_footer_branch
      %20 = sbr.rel target = $region3
    $region8: #{tpu_custom_call.1} parent=1 // loop_exit
      _
    %1677 = vsyncpa [#allocation3], 1
    %s1678 = scalar_lea.sflag [#allocation3], 1
    %1679 = vsyncpa %s1678, 1
    %1680 = vsyncpa [#allocation6], 1
    %1681 = vsyncpa [#allocation9], 1
    %1682 = vsyncpa [#allocation4], 1
    %s1683 = scalar_lea.sflag [#allocation4], 1
    %1684 = vsyncpa %s1683, 1

</llo_original>
